<compile_context>
chip_gen: v5e
topology: v5e:2x2
jax: 0.10.0
libtpu: 0.0.40
codegen_flags: <defaults>
</compile_context>

<pallas_src>
import functools

import numpy as np
import jax
import jax.numpy as jnp
from jax.experimental import pallas as pl
from jax.experimental.pallas import tpu as pltpu


# ----------------------------- Pallas kernel -------------------------------------
def _reng_rollout_kernel(l, p, decays_ref, u_ref, state0_ref, w_big_ref,
                         w_u_ref, w_l_ref, b_ref, out_ref):
    """One batch-block rollout (Bb rollouts on the sublane axis, T steps).

    decays_ref : VMEM (T, 1)         0.95**t per step
    u_ref      : VMEM (T, Bb, m_pad)
    state0_ref : VMEM (Bb, Dp)       x0 placed in lanes [l+p, l+p+n), zeros elsewhere
    w_big_ref  : VMEM (Dp, Dp)       rows [l+p, l+p+n) = W_x (E^-1 and 1/Lambda
                                     folded), all other rows zero
    w_u_ref    : VMEM (m_pad, Dp)    W_u (1/Lambda folded into v lanes)
    w_l_ref    : VMEM (l, Dp)        W_l = [D11^T | D21^T | (E^-1 B1)^T] scaled
    b_ref      : VMEM (1, Dp)        [bv/Lambda | bu | E^-1 bx | 0]
    out_ref    : VMEM (T, Bb, Dp)    per-step acc; y lanes already mapped through
                                     8 + 4.8*sigmoid; lanes [l+p, l+p+n) = x_next
    """
    f32 = jnp.float32
    T, Bb, _ = u_ref.shape
    Dp = out_ref.shape[-1]

    w_big = w_big_ref[...]                                  # (Dp, Dp)
    w_u = w_u_ref[...]                                      # (m_pad, Dp)
    w_l = w_l_ref[...]                                      # (l, Dp)

    # ---- hoisted u-path + decayed bias (independent of the serial x chain) ----
    db = decays_ref[...] * b_ref[...]                       # (T, Dp)
    u_all = u_ref[...]                                      # (T, Bb, m_pad)
    pre = [jnp.dot(u_all[k], w_u, preferred_element_type=f32) + db[k:k + 1, :]
           for k in range(T)]                               # T x (Bb, Dp)

    lane = jax.lax.broadcasted_iota(jnp.int32, (1, Dp), 1)
    is_y = (lane >= l) & (lane < l + p)

    state = state0_ref[...]                                 # (Bb, Dp)
    for k in range(T):                                      # static unroll over T
        # Only this matmul is on the serial dependency chain (MXU, batched rows).
        acc = jnp.dot(state, w_big, preferred_element_type=f32) + pre[k]

        # Strictly-lower-triangular D11 forward substitution (unrolled, VPU/EUP):
        # each eps_i is folded into ALL remaining lanes (future v's, y, x_next)
        # with one (Bb,1)*(1,Dp) outer-product FMA.  1/Lambda is pre-folded.
        for i in range(l):
            e_i = jnp.tanh(acc[:, i:i + 1])                 # (Bb, 1)
            acc = acc + e_i * w_l[i:i + 1, :]

        out_ref[k] = jnp.where(is_y, 8.0 + (12.8 - 8.0) * jax.nn.sigmoid(acc), acc)
        state = acc                                         # x_next lives in acc's x lanes


# ------------------- one-time parameter preparation (plain JAX) -------------------
def prepare_params(P, d_pad=128):
    """Fold E^-1 into the state-update weights, fold 1/Lambda into the v-lane
    columns, transpose, and pad everything to a lane-dense, (8,128)-aligned
    layout.  Column layout: [0,l)=v  [l,l+p)=y  [l+p,l+p+n)=x_next  rest 0."""
    f32 = jnp.float32
    F_, B1, B2, E = P["F"], P["B1"], P["B2"], P["E"]
    C1, D11, D12 = P["C1"], P["D11"], P["D12"]
    C2, D21, D22 = P["C2"], P["D21"], P["D22"]
    Lam, bx, bv, bu = P["Lambda"], P["bx"], P["bv"], P["bu"]

    n = F_.shape[0]
    l = C1.shape[0]
    p = C2.shape[0]
    m = B2.shape[1]
    D = l + p + n
    assert D <= d_pad
    m_pad = -(-m // 8) * 8

    Einv = jnp.linalg.inv(E)
    Fp, B1p, B2p, bxp = Einv @ F_, Einv @ B1, Einv @ B2, Einv @ bx

    # Per-column scale: 1/Lambda on the v lanes only, 1 on y / x lanes.
    scale = jnp.concatenate([1.0 / Lam, jnp.ones((p + n,), f32)])          # (D,)

    W_x = jnp.concatenate([C1.T, C2.T, Fp.T], axis=1) * scale[None, :]     # (n, D)
    W_u = jnp.concatenate([D12.T, D22.T, B2p.T], axis=1) * scale[None, :]  # (m, D)
    W_l = jnp.concatenate([D11.T, D21.T, B1p.T], axis=1) * scale[None, :]  # (l, D)
    b_cat = jnp.concatenate([bv, bu, bxp]) * scale                         # (D,)

    w_big = jnp.zeros((d_pad, d_pad), f32).at[l + p:l + p + n, :D].set(W_x)
    w_u = jnp.zeros((m_pad, d_pad), f32).at[:m, :D].set(W_u)
    w_l = jnp.zeros((l, d_pad), f32).at[:, :D].set(W_l)
    b_row = jnp.zeros((1, d_pad), f32).at[0, :D].set(b_cat)

    return dict(w_big=w_big, w_u=w_u, w_l=w_l, b_row=b_row,
                n=int(n), m=int(m), l=int(l), p=int(p),
                d_pad=int(d_pad), m_pad=int(m_pad))


def make_reng_rollout(prep, block_b=8):
    """Returns a jitted rollout(ts, u_seq, x0) -> (y (B,T,p), x (B,T,n))."""
    assert block_b % 8 == 0
    n, m, l, p = prep["n"], prep["m"], prep["l"], prep["p"]
    d_pad, m_pad = prep["d_pad"], prep["m_pad"]
    w_big, w_u, w_l, b_row = prep["w_big"], prep["w_u"], prep["w_l"], prep["b_row"]
    x_lo = l + p
    f32 = jnp.float32
    kernel = functools.partial(_reng_rollout_kernel, l, p)

    @jax.jit
    def rollout(ts, u_seq, x0):
        # ts: (T,), u_seq: (B, T, m), x0: (B, n)
        B, T, _ = u_seq.shape
        B_pad = -(-B // block_b) * block_b
        nb = B_pad // block_b

        decays = jnp.power(jnp.float32(0.95), ts.astype(f32))[:, None]      # (T, 1)
        # Layout plumbing (wrapper side): time-major, sublane-batched, lane padded.
        u_p = jnp.zeros((T, B_pad, m_pad), f32).at[:, :B, :m].set(
            jnp.transpose(u_seq.astype(f32), (1, 0, 2)))
        state0 = jnp.zeros((B_pad, d_pad), f32).at[:B, x_lo:x_lo + n].set(
            x0.astype(f32))

        out = pl.pallas_call(
            kernel,
            out_shape=jax.ShapeDtypeStruct((T, B_pad, d_pad), f32),
            grid=(nb,),
            in_specs=[
                pl.BlockSpec((T, 1), lambda bi: (0, 0)),                  # decays
                pl.BlockSpec((T, block_b, m_pad), lambda bi: (0, bi, 0)),  # u
                pl.BlockSpec((block_b, d_pad), lambda bi: (bi, 0)),        # state0
                pl.BlockSpec((d_pad, d_pad), lambda bi: (0, 0)),           # W_big
                pl.BlockSpec((m_pad, d_pad), lambda bi: (0, 0)),           # W_u
                pl.BlockSpec((w_l.shape[0], d_pad), lambda bi: (0, 0)),    # W_l
                pl.BlockSpec((1, d_pad), lambda bi: (0, 0)),               # b
            ],
            out_specs=pl.BlockSpec((T, block_b, d_pad), lambda bi: (0, bi, 0)),
            compiler_params=pltpu.CompilerParams(
                dimension_semantics=("parallel",)),       # batch blocks across TCs
        )(decays, u_p, state0, w_big, w_u, w_l, b_row)

        y = jnp.transpose(out[:, :B, l:l + p], (1, 0, 2))            # (B, T, p)
        x = jnp.transpose(out[:, :B, x_lo:x_lo + n], (1, 0, 2))      # (B, T, n)
        return y, x

    return rollout


# ------------------------ REN parameterization (plain-JAX glue) -------------------
def reng_init_and_set_param(key, m, p, n, l, gamma=1.0, eps_reg=1e-3):
    """Deterministic parameter init (std=1 normals) + set_param(mode='l2stable')."""
    ks = jax.random.split(key, 9)
    X = jax.random.normal(ks[0], (2 * n + l, 2 * n + l), jnp.float32)
    Y = jax.random.normal(ks[1], (n, n), jnp.float32)
    Z3 = jax.random.normal(ks[2], (abs(p - m), min(p, m)), jnp.float32)
    X3 = jax.random.normal(ks[3], (min(p, m), min(p, m)), jnp.float32)
    Y3 = jax.random.normal(ks[4], (min(p, m), min(p, m)), jnp.float32)
    D12 = jax.random.normal(ks[5], (l, m), jnp.float32)
    B2 = jax.random.normal(ks[6], (n, m), jnp.float32)
    C2 = jax.random.normal(ks[7], (p, n), jnp.float32)
    # bias=False
    bx = jnp.zeros((n,), jnp.float32)
    bv = jnp.zeros((l,), jnp.float32)
    bu = jnp.zeros((p,), jnp.float32)
    D21 = jnp.zeros((p, l), jnp.float32)

    # mode == 'l2stable'
    Q = -(1.0 / gamma) * jnp.eye(p, dtype=jnp.float32)
    R = gamma * jnp.eye(m, dtype=jnp.float32)
    S = jnp.zeros((m, p), jnp.float32)

    mi = min(p, m)
    M = X3.T @ X3 + Y3 - Y3.T + Z3.T @ Z3 + eps_reg * jnp.eye(mi, dtype=jnp.float32)
    if p >= m:
        Iinv = jnp.linalg.inv(jnp.eye(m, dtype=jnp.float32) + M)
        N = jnp.vstack([(jnp.eye(m, dtype=jnp.float32) - M) @ Iinv, -2.0 * Z3 @ Iinv])
    else:
        Iinv = jnp.linalg.inv(jnp.eye(p, dtype=jnp.float32) + M)
        N = jnp.hstack([Iinv @ (jnp.eye(p, dtype=jnp.float32) - M), -2.0 * Iinv @ Z3.T])

    Lq = jnp.linalg.cholesky(-Q).T
    Lr = jnp.linalg.cholesky(R - S @ jnp.linalg.inv(Q) @ S.T).T
    D22 = -jnp.linalg.inv(Q) @ S.T + jnp.linalg.inv(Lq) @ N @ Lr

    R_cal = R + S @ D22 + (S @ D22).T + D22.T @ Q @ D22
    R_cal_inv = jnp.linalg.inv(R_cal)
    C2_cal = ((D22.T @ Q + S) @ C2).T
    D21_cal = ((D22.T @ Q + S) @ D21).T - D12
    vec_r = jnp.concatenate([C2_cal, D21_cal, B2], axis=0)
    psi_r = vec_r @ R_cal_inv @ vec_r.T
    vec_q = jnp.concatenate([C2.T, D21.T, jnp.zeros((n, p), jnp.float32)], axis=0)
    psi_q = vec_q @ Q @ vec_q.T

    H = X.T @ X + eps_reg * jnp.eye(2 * n + l, dtype=jnp.float32) + psi_r - psi_q
    H11 = H[:n, :n]
    H21 = H[n:n + l, :n]
    H22 = H[n:n + l, n:n + l]
    H31 = H[n + l:, :n]
    H32 = H[n + l:, n:n + l]
    H33 = H[n + l:, n + l:]

    P_cal = H33
    Fm = H31
    B1 = H32
    E = 0.5 * (H11 + P_cal + Y - Y.T)
    Lambda = 0.5 * jnp.diag(H22)
    D11 = -jnp.tril(H22, k=-1)
    C1 = -H21

    return dict(F=Fm, B1=B1, B2=B2, E=E, C1=C1, D11=D11, D12=D12,
                C2=C2, D21=D21, D22=D22, Lambda=Lambda, bx=bx, bv=bv, bu=bu)


# ----------------------------- pure-JAX reference ---------------------------------
def reng_forward_ref(t, u, x, P):
    """The module's forward(), vectorized over batch rows. u: (B,m), x: (B,n)."""
    decay = 0.95 ** float(t)
    l = P["C1"].shape[0]
    B = x.shape[0]
    eps = jnp.zeros((B, l), jnp.float32)
    for i in range(l):
        v = (x @ P["C1"][i] + eps @ P["D11"][i] + u @ P["D12"][i]
             + decay * P["bv"][i])                              # (B,)
        eps = eps.at[:, i].set(jnp.tanh(v / P["Lambda"][i]))
    ex = x @ P["F"].T + eps @ P["B1"].T + u @ P["B2"].T + decay * P["bx"]
    x_next = ex @ jnp.linalg.inv(P["E"]).T
    y = x @ P["C2"].T + eps @ P["D21"].T + u @ P["D22"].T + decay * P["bu"]
    y = 8.0 + (12.8 - 8.0) * jax.nn.sigmoid(y)
    return y, x_next


# --------------------------------------- main -------------------------------------
if __name__ == "__main__":
    m, p, n, l = 4, 3, 8, 8      # input dim, output dim, state dim, nonlinearity dim
    T = 8                        # rollout length fused into one pallas_call
    B = 16                       # batched rollouts: sublane batching + 2 "parallel" grid blocks
    key = jax.random.PRNGKey(0)
    kp, ku, kx = jax.random.split(key, 3)

    params = reng_init_and_set_param(kp, m=m, p=p, n=n, l=l, gamma=1.0)
    prep = prepare_params(params)
    rollout = make_reng_rollout(prep, block_b=8)

    t0 = 3.0
    ts = t0 + jnp.arange(T, dtype=jnp.float32)
    u_seq = jax.random.normal(ku, (B, T, m), jnp.float32)
    x0 = jax.random.normal(kx, (B, n), jnp.float32)

    # Fused, batched T-step rollout in one kernel launch.
    y_seq, x_seq = rollout(ts, u_seq, x0)
    jax.block_until_ready((y_seq, x_seq))

    # Reference: apply the module's single-step forward T times (batched rows).
    x = x0
    ys, xs = [], []
    for k in range(T):
        y_r, x = reng_forward_ref(float(ts[k]), u_seq[:, k, :], x, params)
        ys.append(y_r)
        xs.append(x)
    y_ref = jnp.stack(ys, axis=1)    # (B, T, p)
    x_ref = jnp.stack(xs, axis=1)    # (B, T, n)

    np.testing.assert_allclose(np.asarray(y_seq), np.asarray(y_ref), rtol=2e-2, atol=2e-2)
    np.testing.assert_allclose(np.asarray(x_seq), np.asarray(x_ref), rtol=2e-2, atol=2e-2)

    # Single-step, single-rollout call (T=1, B=1) == the original module forward(t, u, x).
    y1, x1 = rollout(jnp.asarray([t0], jnp.float32), u_seq[:1, :1], x0[:1])
    jax.block_until_ready((y1, x1))
    y1_ref, x1_ref = reng_forward_ref(t0, u_seq[0, :1], x0[:1], params)
    np.testing.assert_allclose(np.asarray(y1[:, 0]), np.asarray(y1_ref), rtol=2e-2, atol=2e-2)
    np.testing.assert_allclose(np.asarray(x1[:, 0]), np.asarray(x1_ref), rtol=2e-2, atol=2e-2)

    print("KERNEL_OK")
</pallas_src>

<mosaic_0001>
module attributes {stable_mosaic.version = 11 : i64} {
  func.func @_reng_rollout_kernel(%arg0: i32, %arg1: memref<8x1xf32, #tpu.memory_space<vmem>>, %arg2: memref<8x8x8xf32, #tpu.memory_space<vmem>>, %arg3: memref<8x128xf32, #tpu.memory_space<vmem>>, %arg4: memref<128x128xf32, #tpu.memory_space<vmem>>, %arg5: memref<8x128xf32, #tpu.memory_space<vmem>>, %arg6: memref<8x128xf32, #tpu.memory_space<vmem>>, %arg7: memref<1x128xf32, #tpu.memory_space<vmem>>, %arg8: memref<8x8x128xf32, #tpu.memory_space<vmem>>) attributes {dimension_semantics = [#tpu.dimension_semantics<parallel>], iteration_bounds = array<i64: 2>, scalar_prefetch = 0 : i64, scratch_operands = 0 : i64, tpu.core_type = #tpu.core_type<tc>, window_params = [{pipeline_mode = #tpu.pipeline_mode<synchronous>, transform_indices = @transform_0, window_bounds = array<i64: 8, 1>}, {transform_indices = @transform_1, window_bounds = array<i64: 8, 8, 8>}, {transform_indices = @transform_2, window_bounds = array<i64: 8, 128>}, {pipeline_mode = #tpu.pipeline_mode<synchronous>, transform_indices = @transform_3, window_bounds = array<i64: 128, 128>}, {pipeline_mode = #tpu.pipeline_mode<synchronous>, transform_indices = @transform_4, window_bounds = array<i64: 8, 128>}, {pipeline_mode = #tpu.pipeline_mode<synchronous>, transform_indices = @transform_5, window_bounds = array<i64: 8, 128>}, {pipeline_mode = #tpu.pipeline_mode<synchronous>, transform_indices = @transform_6, window_bounds = array<i64: 1, 128>}, {transform_indices = @transform_7, window_bounds = array<i64: 8, 8, 128>}]} {
    %c0 = arith.constant 0 : index
    %c0_0 = arith.constant 0 : index
    %0 = vector.load %arg4[%c0, %c0_0] : memref<128x128xf32, #tpu.memory_space<vmem>>, vector<128x128xf32>
    %c0_1 = arith.constant 0 : index
    %c0_2 = arith.constant 0 : index
    %1 = vector.load %arg5[%c0_1, %c0_2] : memref<8x128xf32, #tpu.memory_space<vmem>>, vector<8x128xf32>
    %c0_3 = arith.constant 0 : index
    %c0_4 = arith.constant 0 : index
    %2 = vector.load %arg6[%c0_3, %c0_4] : memref<8x128xf32, #tpu.memory_space<vmem>>, vector<8x128xf32>
    %c0_5 = arith.constant 0 : index
    %c0_6 = arith.constant 0 : index
    %3 = vector.load %arg1[%c0_5, %c0_6] : memref<8x1xf32, #tpu.memory_space<vmem>>, vector<8x1xf32>
    %c0_7 = arith.constant 0 : index
    %c0_8 = arith.constant 0 : index
    %4 = vector.load %arg7[%c0_7, %c0_8] : memref<1x128xf32, #tpu.memory_space<vmem>>, vector<1x128xf32>
    %5 = vector.broadcast %3 : vector<8x1xf32> to vector<8x128xf32>
    %6 = vector.broadcast %4 : vector<1x128xf32> to vector<8x128xf32>
    %7 = arith.mulf %5, %6 : vector<8x128xf32>
    %c0_9 = arith.constant 0 : index
    %c0_10 = arith.constant 0 : index
    %c0_11 = arith.constant 0 : index
    %8 = vector.load %arg2[%c0_9, %c0_10, %c0_11] : memref<8x8x8xf32, #tpu.memory_space<vmem>>, vector<8x8x8xf32>
    %9 = vector.extract_strided_slice %8 {offsets = [0, 0, 0], sizes = [1, 8, 8], strides = [1, 1, 1]} : vector<8x8x8xf32> to vector<1x8x8xf32>
    %10 = vector.shape_cast %9 : vector<1x8x8xf32> to vector<8x8xf32>
    %cst = arith.constant dense<0.000000e+00> : vector<8x128xf32>
    %11 = tpu.matmul %10, %1, %cst {dimension_numbers = #tpu.dot_dimension_numbers<[1], [0], [0], [1], [0, 0, 1, 1], [], []>} : vector<8x8xf32>, vector<8x128xf32>, vector<8x128xf32> -> vector<8x128xf32>
    %12 = vector.extract_strided_slice %7 {offsets = [0, 0], sizes = [1, 128], strides = [1, 1]} : vector<8x128xf32> to vector<1x128xf32>
    %13 = vector.broadcast %12 : vector<1x128xf32> to vector<8x128xf32>
    %14 = arith.addf %11, %13 : vector<8x128xf32>
    %15 = vector.extract_strided_slice %8 {offsets = [1, 0, 0], sizes = [1, 8, 8], strides = [1, 1, 1]} : vector<8x8x8xf32> to vector<1x8x8xf32>
    %16 = vector.shape_cast %15 : vector<1x8x8xf32> to vector<8x8xf32>
    %cst_12 = arith.constant dense<0.000000e+00> : vector<8x128xf32>
    %17 = tpu.matmul %16, %1, %cst_12 {dimension_numbers = #tpu.dot_dimension_numbers<[1], [0], [0], [1], [0, 0, 1, 1], [], []>} : vector<8x8xf32>, vector<8x128xf32>, vector<8x128xf32> -> vector<8x128xf32>
    %18 = vector.extract_strided_slice %7 {offsets = [1, 0], sizes = [1, 128], strides = [1, 1]} : vector<8x128xf32> to vector<1x128xf32>
    %19 = vector.broadcast %18 : vector<1x128xf32> to vector<8x128xf32>
    %20 = arith.addf %17, %19 : vector<8x128xf32>
    %21 = vector.extract_strided_slice %8 {offsets = [2, 0, 0], sizes = [1, 8, 8], strides = [1, 1, 1]} : vector<8x8x8xf32> to vector<1x8x8xf32>
    %22 = vector.shape_cast %21 : vector<1x8x8xf32> to vector<8x8xf32>
    %cst_13 = arith.constant dense<0.000000e+00> : vector<8x128xf32>
    %23 = tpu.matmul %22, %1, %cst_13 {dimension_numbers = #tpu.dot_dimension_numbers<[1], [0], [0], [1], [0, 0, 1, 1], [], []>} : vector<8x8xf32>, vector<8x128xf32>, vector<8x128xf32> -> vector<8x128xf32>
    %24 = vector.extract_strided_slice %7 {offsets = [2, 0], sizes = [1, 128], strides = [1, 1]} : vector<8x128xf32> to vector<1x128xf32>
    %25 = vector.broadcast %24 : vector<1x128xf32> to vector<8x128xf32>
    %26 = arith.addf %23, %25 : vector<8x128xf32>
    %27 = vector.extract_strided_slice %8 {offsets = [3, 0, 0], sizes = [1, 8, 8], strides = [1, 1, 1]} : vector<8x8x8xf32> to vector<1x8x8xf32>
    %28 = vector.shape_cast %27 : vector<1x8x8xf32> to vector<8x8xf32>
    %cst_14 = arith.constant dense<0.000000e+00> : vector<8x128xf32>
    %29 = tpu.matmul %28, %1, %cst_14 {dimension_numbers = #tpu.dot_dimension_numbers<[1], [0], [0], [1], [0, 0, 1, 1], [], []>} : vector<8x8xf32>, vector<8x128xf32>, vector<8x128xf32> -> vector<8x128xf32>
    %30 = vector.extract_strided_slice %7 {offsets = [3, 0], sizes = [1, 128], strides = [1, 1]} : vector<8x128xf32> to vector<1x128xf32>
    %31 = vector.broadcast %30 : vector<1x128xf32> to vector<8x128xf32>
    %32 = arith.addf %29, %31 : vector<8x128xf32>
    %33 = vector.extract_strided_slice %8 {offsets = [4, 0, 0], sizes = [1, 8, 8], strides = [1, 1, 1]} : vector<8x8x8xf32> to vector<1x8x8xf32>
    %34 = vector.shape_cast %33 : vector<1x8x8xf32> to vector<8x8xf32>
    %cst_15 = arith.constant dense<0.000000e+00> : vector<8x128xf32>
    %35 = tpu.matmul %34, %1, %cst_15 {dimension_numbers = #tpu.dot_dimension_numbers<[1], [0], [0], [1], [0, 0, 1, 1], [], []>} : vector<8x8xf32>, vector<8x128xf32>, vector<8x128xf32> -> vector<8x128xf32>
    %36 = vector.extract_strided_slice %7 {offsets = [4, 0], sizes = [1, 128], strides = [1, 1]} : vector<8x128xf32> to vector<1x128xf32>
    %37 = vector.broadcast %36 : vector<1x128xf32> to vector<8x128xf32>
    %38 = arith.addf %35, %37 : vector<8x128xf32>
    %39 = vector.extract_strided_slice %8 {offsets = [5, 0, 0], sizes = [1, 8, 8], strides = [1, 1, 1]} : vector<8x8x8xf32> to vector<1x8x8xf32>
    %40 = vector.shape_cast %39 : vector<1x8x8xf32> to vector<8x8xf32>
    %cst_16 = arith.constant dense<0.000000e+00> : vector<8x128xf32>
    %41 = tpu.matmul %40, %1, %cst_16 {dimension_numbers = #tpu.dot_dimension_numbers<[1], [0], [0], [1], [0, 0, 1, 1], [], []>} : vector<8x8xf32>, vector<8x128xf32>, vector<8x128xf32> -> vector<8x128xf32>
    %42 = vector.extract_strided_slice %7 {offsets = [5, 0], sizes = [1, 128], strides = [1, 1]} : vector<8x128xf32> to vector<1x128xf32>
    %43 = vector.broadcast %42 : vector<1x128xf32> to vector<8x128xf32>
    %44 = arith.addf %41, %43 : vector<8x128xf32>
    %45 = vector.extract_strided_slice %8 {offsets = [6, 0, 0], sizes = [1, 8, 8], strides = [1, 1, 1]} : vector<8x8x8xf32> to vector<1x8x8xf32>
    %46 = vector.shape_cast %45 : vector<1x8x8xf32> to vector<8x8xf32>
    %cst_17 = arith.constant dense<0.000000e+00> : vector<8x128xf32>
    %47 = tpu.matmul %46, %1, %cst_17 {dimension_numbers = #tpu.dot_dimension_numbers<[1], [0], [0], [1], [0, 0, 1, 1], [], []>} : vector<8x8xf32>, vector<8x128xf32>, vector<8x128xf32> -> vector<8x128xf32>
    %48 = vector.extract_strided_slice %7 {offsets = [6, 0], sizes = [1, 128], strides = [1, 1]} : vector<8x128xf32> to vector<1x128xf32>
    %49 = vector.broadcast %48 : vector<1x128xf32> to vector<8x128xf32>
    %50 = arith.addf %47, %49 : vector<8x128xf32>
    %51 = vector.extract_strided_slice %8 {offsets = [7, 0, 0], sizes = [1, 8, 8], strides = [1, 1, 1]} : vector<8x8x8xf32> to vector<1x8x8xf32>
    %52 = vector.shape_cast %51 : vector<1x8x8xf32> to vector<8x8xf32>
    %cst_18 = arith.constant dense<0.000000e+00> : vector<8x128xf32>
    %53 = tpu.matmul %52, %1, %cst_18 {dimension_numbers = #tpu.dot_dimension_numbers<[1], [0], [0], [1], [0, 0, 1, 1], [], []>} : vector<8x8xf32>, vector<8x128xf32>, vector<8x128xf32> -> vector<8x128xf32>
    %54 = vector.extract_strided_slice %7 {offsets = [7, 0], sizes = [1, 128], strides = [1, 1]} : vector<8x128xf32> to vector<1x128xf32>
    %55 = vector.broadcast %54 : vector<1x128xf32> to vector<8x128xf32>
    %56 = arith.addf %53, %55 : vector<8x128xf32>
    %57 = tpu.iota {dimensions = array<i32: 1>} : vector<1x128xi32>
    %c8_i32 = arith.constant 8 : i32
    %58 = vector.broadcast %c8_i32 : i32 to vector<1x128xi32>
    %59 = arith.cmpi sge, %57, %58 : vector<1x128xi32>
    %c11_i32 = arith.constant 11 : i32
    %60 = vector.broadcast %c11_i32 : i32 to vector<1x128xi32>
    %61 = arith.cmpi slt, %57, %60 : vector<1x128xi32>
    %62 = arith.andi %59, %61 : vector<1x128xi1>
    %c0_19 = arith.constant 0 : index
    %c0_20 = arith.constant 0 : index
    %63 = vector.load %arg3[%c0_19, %c0_20] : memref<8x128xf32, #tpu.memory_space<vmem>>, vector<8x128xf32>
    %cst_21 = arith.constant dense<0.000000e+00> : vector<8x128xf32>
    %64 = tpu.matmul %63, %0, %cst_21 {dimension_numbers = #tpu.dot_dimension_numbers<[1], [0], [0], [1], [0, 0, 1, 1], [], []>} : vector<8x128xf32>, vector<128x128xf32>, vector<8x128xf32> -> vector<8x128xf32>
    %65 = arith.addf %64, %14 : vector<8x128xf32>
    %66 = vector.extract_strided_slice %65 {offsets = [0, 0], sizes = [8, 1], strides = [1, 1]} : vector<8x128xf32> to vector<8x1xf32>
    %67 = math.tanh %66 : vector<8x1xf32>
    %68 = vector.extract_strided_slice %2 {offsets = [0, 0], sizes = [1, 128], strides = [1, 1]} : vector<8x128xf32> to vector<1x128xf32>
    %69 = vector.broadcast %67 : vector<8x1xf32> to vector<8x128xf32>
    %70 = vector.broadcast %68 : vector<1x128xf32> to vector<8x128xf32>
    %71 = arith.mulf %69, %70 : vector<8x128xf32>
    %72 = arith.addf %65, %71 : vector<8x128xf32>
    %73 = vector.extract_strided_slice %72 {offsets = [0, 1], sizes = [8, 1], strides = [1, 1]} : vector<8x128xf32> to vector<8x1xf32>
    %74 = math.tanh %73 : vector<8x1xf32>
    %75 = vector.extract_strided_slice %2 {offsets = [1, 0], sizes = [1, 128], strides = [1, 1]} : vector<8x128xf32> to vector<1x128xf32>
    %76 = vector.broadcast %74 : vector<8x1xf32> to vector<8x128xf32>
    %77 = vector.broadcast %75 : vector<1x128xf32> to vector<8x128xf32>
    %78 = arith.mulf %76, %77 : vector<8x128xf32>
    %79 = arith.addf %72, %78 : vector<8x128xf32>
    %80 = vector.extract_strided_slice %79 {offsets = [0, 2], sizes = [8, 1], strides = [1, 1]} : vector<8x128xf32> to vector<8x1xf32>
    %81 = math.tanh %80 : vector<8x1xf32>
    %82 = vector.extract_strided_slice %2 {offsets = [2, 0], sizes = [1, 128], strides = [1, 1]} : vector<8x128xf32> to vector<1x128xf32>
    %83 = vector.broadcast %81 : vector<8x1xf32> to vector<8x128xf32>
    %84 = vector.broadcast %82 : vector<1x128xf32> to vector<8x128xf32>
    %85 = arith.mulf %83, %84 : vector<8x128xf32>
    %86 = arith.addf %79, %85 : vector<8x128xf32>
    %87 = vector.extract_strided_slice %86 {offsets = [0, 3], sizes = [8, 1], strides = [1, 1]} : vector<8x128xf32> to vector<8x1xf32>
    %88 = math.tanh %87 : vector<8x1xf32>
    %89 = vector.extract_strided_slice %2 {offsets = [3, 0], sizes = [1, 128], strides = [1, 1]} : vector<8x128xf32> to vector<1x128xf32>
    %90 = vector.broadcast %88 : vector<8x1xf32> to vector<8x128xf32>
    %91 = vector.broadcast %89 : vector<1x128xf32> to vector<8x128xf32>
    %92 = arith.mulf %90, %91 : vector<8x128xf32>
    %93 = arith.addf %86, %92 : vector<8x128xf32>
    %94 = vector.extract_strided_slice %93 {offsets = [0, 4], sizes = [8, 1], strides = [1, 1]} : vector<8x128xf32> to vector<8x1xf32>
    %95 = math.tanh %94 : vector<8x1xf32>
    %96 = vector.extract_strided_slice %2 {offsets = [4, 0], sizes = [1, 128], strides = [1, 1]} : vector<8x128xf32> to vector<1x128xf32>
    %97 = vector.broadcast %95 : vector<8x1xf32> to vector<8x128xf32>
    %98 = vector.broadcast %96 : vector<1x128xf32> to vector<8x128xf32>
    %99 = arith.mulf %97, %98 : vector<8x128xf32>
    %100 = arith.addf %93, %99 : vector<8x128xf32>
    %101 = vector.extract_strided_slice %100 {offsets = [0, 5], sizes = [8, 1], strides = [1, 1]} : vector<8x128xf32> to vector<8x1xf32>
    %102 = math.tanh %101 : vector<8x1xf32>
    %103 = vector.extract_strided_slice %2 {offsets = [5, 0], sizes = [1, 128], strides = [1, 1]} : vector<8x128xf32> to vector<1x128xf32>
    %104 = vector.broadcast %102 : vector<8x1xf32> to vector<8x128xf32>
    %105 = vector.broadcast %103 : vector<1x128xf32> to vector<8x128xf32>
    %106 = arith.mulf %104, %105 : vector<8x128xf32>
    %107 = arith.addf %100, %106 : vector<8x128xf32>
    %108 = vector.extract_strided_slice %107 {offsets = [0, 6], sizes = [8, 1], strides = [1, 1]} : vector<8x128xf32> to vector<8x1xf32>
    %109 = math.tanh %108 : vector<8x1xf32>
    %110 = vector.extract_strided_slice %2 {offsets = [6, 0], sizes = [1, 128], strides = [1, 1]} : vector<8x128xf32> to vector<1x128xf32>
    %111 = vector.broadcast %109 : vector<8x1xf32> to vector<8x128xf32>
    %112 = vector.broadcast %110 : vector<1x128xf32> to vector<8x128xf32>
    %113 = arith.mulf %111, %112 : vector<8x128xf32>
    %114 = arith.addf %107, %113 : vector<8x128xf32>
    %115 = vector.extract_strided_slice %114 {offsets = [0, 7], sizes = [8, 1], strides = [1, 1]} : vector<8x128xf32> to vector<8x1xf32>
    %116 = math.tanh %115 : vector<8x1xf32>
    %117 = vector.extract_strided_slice %2 {offsets = [7, 0], sizes = [1, 128], strides = [1, 1]} : vector<8x128xf32> to vector<1x128xf32>
    %118 = vector.broadcast %116 : vector<8x1xf32> to vector<8x128xf32>
    %119 = vector.broadcast %117 : vector<1x128xf32> to vector<8x128xf32>
    %120 = arith.mulf %118, %119 : vector<8x128xf32>
    %121 = arith.addf %114, %120 : vector<8x128xf32>
    %122 = arith.negf %121 : vector<8x128xf32>
    %123 = math.exp %122 : vector<8x128xf32>
    %cst_22 = arith.constant 1.000000e+00 : f32
    %124 = vector.broadcast %cst_22 : f32 to vector<8x128xf32>
    %125 = arith.addf %124, %123 : vector<8x128xf32>
    %126 = arith.divf %124, %125 : vector<8x128xf32>
    %cst_23 = arith.constant 4.800000e+00 : f32
    %127 = vector.broadcast %cst_23 : f32 to vector<8x128xf32>
    %128 = arith.mulf %127, %126 : vector<8x128xf32>
    %cst_24 = arith.constant 8.000000e+00 : f32
    %129 = vector.broadcast %cst_24 : f32 to vector<8x128xf32>
    %130 = arith.addf %129, %128 : vector<8x128xf32>
    %131 = vector.shape_cast %62 : vector<1x128xi1> to vector<1x128xi1>
    %132 = vector.broadcast %131 : vector<1x128xi1> to vector<8x128xi1>
    %133 = arith.select %132, %130, %121 : vector<8x128xi1>, vector<8x128xf32>
    %c0_25 = arith.constant 0 : index
    %c0_26 = arith.constant 0 : index
    %c0_27 = arith.constant 0 : index
    %134 = vector.load %arg8[%c0_25, %c0_26, %c0_27] : memref<8x8x128xf32, #tpu.memory_space<vmem>>, vector<1x8x128xf32>
    %135 = vector.shape_cast %134 : vector<1x8x128xf32> to vector<8x128xf32>
    %136 = vector.shape_cast %133 : vector<8x128xf32> to vector<1x8x128xf32>
    tpu.vector_store %arg8[%c0_25, %c0_26, %c0_27], %136 {strides = array<i32>} : memref<8x8x128xf32, #tpu.memory_space<vmem>>, vector<1x8x128xf32>,
    %cst_28 = arith.constant dense<0.000000e+00> : vector<8x128xf32>
    %137 = tpu.matmul %121, %0, %cst_28 {dimension_numbers = #tpu.dot_dimension_numbers<[1], [0], [0], [1], [0, 0, 1, 1], [], []>} : vector<8x128xf32>, vector<128x128xf32>, vector<8x128xf32> -> vector<8x128xf32>
    %138 = arith.addf %137, %20 : vector<8x128xf32>
    %139 = vector.extract_strided_slice %138 {offsets = [0, 0], sizes = [8, 1], strides = [1, 1]} : vector<8x128xf32> to vector<8x1xf32>
    %140 = math.tanh %139 : vector<8x1xf32>
    %141 = vector.extract_strided_slice %2 {offsets = [0, 0], sizes = [1, 128], strides = [1, 1]} : vector<8x128xf32> to vector<1x128xf32>
    %142 = vector.broadcast %140 : vector<8x1xf32> to vector<8x128xf32>
    %143 = vector.broadcast %141 : vector<1x128xf32> to vector<8x128xf32>
    %144 = arith.mulf %142, %143 : vector<8x128xf32>
    %145 = arith.addf %138, %144 : vector<8x128xf32>
    %146 = vector.extract_strided_slice %145 {offsets = [0, 1], sizes = [8, 1], strides = [1, 1]} : vector<8x128xf32> to vector<8x1xf32>
    %147 = math.tanh %146 : vector<8x1xf32>
    %148 = vector.extract_strided_slice %2 {offsets = [1, 0], sizes = [1, 128], strides = [1, 1]} : vector<8x128xf32> to vector<1x128xf32>
    %149 = vector.broadcast %147 : vector<8x1xf32> to vector<8x128xf32>
    %150 = vector.broadcast %148 : vector<1x128xf32> to vector<8x128xf32>
    %151 = arith.mulf %149, %150 : vector<8x128xf32>
    %152 = arith.addf %145, %151 : vector<8x128xf32>
    %153 = vector.extract_strided_slice %152 {offsets = [0, 2], sizes = [8, 1], strides = [1, 1]} : vector<8x128xf32> to vector<8x1xf32>
    %154 = math.tanh %153 : vector<8x1xf32>
    %155 = vector.extract_strided_slice %2 {offsets = [2, 0], sizes = [1, 128], strides = [1, 1]} : vector<8x128xf32> to vector<1x128xf32>
    %156 = vector.broadcast %154 : vector<8x1xf32> to vector<8x128xf32>
    %157 = vector.broadcast %155 : vector<1x128xf32> to vector<8x128xf32>
    %158 = arith.mulf %156, %157 : vector<8x128xf32>
    %159 = arith.addf %152, %158 : vector<8x128xf32>
    %160 = vector.extract_strided_slice %159 {offsets = [0, 3], sizes = [8, 1], strides = [1, 1]} : vector<8x128xf32> to vector<8x1xf32>
    %161 = math.tanh %160 : vector<8x1xf32>
    %162 = vector.extract_strided_slice %2 {offsets = [3, 0], sizes = [1, 128], strides = [1, 1]} : vector<8x128xf32> to vector<1x128xf32>
    %163 = vector.broadcast %161 : vector<8x1xf32> to vector<8x128xf32>
    %164 = vector.broadcast %162 : vector<1x128xf32> to vector<8x128xf32>
    %165 = arith.mulf %163, %164 : vector<8x128xf32>
    %166 = arith.addf %159, %165 : vector<8x128xf32>
    %167 = vector.extract_strided_slice %166 {offsets = [0, 4], sizes = [8, 1], strides = [1, 1]} : vector<8x128xf32> to vector<8x1xf32>
    %168 = math.tanh %167 : vector<8x1xf32>
    %169 = vector.extract_strided_slice %2 {offsets = [4, 0], sizes = [1, 128], strides = [1, 1]} : vector<8x128xf32> to vector<1x128xf32>
    %170 = vector.broadcast %168 : vector<8x1xf32> to vector<8x128xf32>
    %171 = vector.broadcast %169 : vector<1x128xf32> to vector<8x128xf32>
    %172 = arith.mulf %170, %171 : vector<8x128xf32>
    %173 = arith.addf %166, %172 : vector<8x128xf32>
    %174 = vector.extract_strided_slice %173 {offsets = [0, 5], sizes = [8, 1], strides = [1, 1]} : vector<8x128xf32> to vector<8x1xf32>
    %175 = math.tanh %174 : vector<8x1xf32>
    %176 = vector.extract_strided_slice %2 {offsets = [5, 0], sizes = [1, 128], strides = [1, 1]} : vector<8x128xf32> to vector<1x128xf32>
    %177 = vector.broadcast %175 : vector<8x1xf32> to vector<8x128xf32>
    %178 = vector.broadcast %176 : vector<1x128xf32> to vector<8x128xf32>
    %179 = arith.mulf %177, %178 : vector<8x128xf32>
    %180 = arith.addf %173, %179 : vector<8x128xf32>
    %181 = vector.extract_strided_slice %180 {offsets = [0, 6], sizes = [8, 1], strides = [1, 1]} : vector<8x128xf32> to vector<8x1xf32>
    %182 = math.tanh %181 : vector<8x1xf32>
    %183 = vector.extract_strided_slice %2 {offsets = [6, 0], sizes = [1, 128], strides = [1, 1]} : vector<8x128xf32> to vector<1x128xf32>
    %184 = vector.broadcast %182 : vector<8x1xf32> to vector<8x128xf32>
    %185 = vector.broadcast %183 : vector<1x128xf32> to vector<8x128xf32>
    %186 = arith.mulf %184, %185 : vector<8x128xf32>
    %187 = arith.addf %180, %186 : vector<8x128xf32>
    %188 = vector.extract_strided_slice %187 {offsets = [0, 7], sizes = [8, 1], strides = [1, 1]} : vector<8x128xf32> to vector<8x1xf32>
    %189 = math.tanh %188 : vector<8x1xf32>
    %190 = vector.extract_strided_slice %2 {offsets = [7, 0], sizes = [1, 128], strides = [1, 1]} : vector<8x128xf32> to vector<1x128xf32>
    %191 = vector.broadcast %189 : vector<8x1xf32> to vector<8x128xf32>
    %192 = vector.broadcast %190 : vector<1x128xf32> to vector<8x128xf32>
    %193 = arith.mulf %191, %192 : vector<8x128xf32>
    %194 = arith.addf %187, %193 : vector<8x128xf32>
    %195 = arith.negf %194 : vector<8x128xf32>
    %196 = math.exp %195 : vector<8x128xf32>
    %cst_29 = arith.constant 1.000000e+00 : f32
    %197 = vector.broadcast %cst_29 : f32 to vector<8x128xf32>
    %198 = arith.addf %197, %196 : vector<8x128xf32>
    %199 = arith.divf %197, %198 : vector<8x128xf32>
    %cst_30 = arith.constant 4.800000e+00 : f32
    %200 = vector.broadcast %cst_30 : f32 to vector<8x128xf32>
    %201 = arith.mulf %200, %199 : vector<8x128xf32>
    %cst_31 = arith.constant 8.000000e+00 : f32
    %202 = vector.broadcast %cst_31 : f32 to vector<8x128xf32>
    %203 = arith.addf %202, %201 : vector<8x128xf32>
    %204 = vector.shape_cast %62 : vector<1x128xi1> to vector<1x128xi1>
    %205 = vector.broadcast %204 : vector<1x128xi1> to vector<8x128xi1>
    %206 = arith.select %205, %203, %194 : vector<8x128xi1>, vector<8x128xf32>
    %c1 = arith.constant 1 : index
    %c0_32 = arith.constant 0 : index
    %c0_33 = arith.constant 0 : index
    %207 = vector.load %arg8[%c1, %c0_32, %c0_33] : memref<8x8x128xf32, #tpu.memory_space<vmem>>, vector<1x8x128xf32>
    %208 = vector.shape_cast %207 : vector<1x8x128xf32> to vector<8x128xf32>
    %209 = vector.shape_cast %206 : vector<8x128xf32> to vector<1x8x128xf32>
    tpu.vector_store %arg8[%c1, %c0_32, %c0_33], %209 {strides = array<i32>} : memref<8x8x128xf32, #tpu.memory_space<vmem>>, vector<1x8x128xf32>,
    %cst_34 = arith.constant dense<0.000000e+00> : vector<8x128xf32>
    %210 = tpu.matmul %194, %0, %cst_34 {dimension_numbers = #tpu.dot_dimension_numbers<[1], [0], [0], [1], [0, 0, 1, 1], [], []>} : vector<8x128xf32>, vector<128x128xf32>, vector<8x128xf32> -> vector<8x128xf32>
    %211 = arith.addf %210, %26 : vector<8x128xf32>
    %212 = vector.extract_strided_slice %211 {offsets = [0, 0], sizes = [8, 1], strides = [1, 1]} : vector<8x128xf32> to vector<8x1xf32>
    %213 = math.tanh %212 : vector<8x1xf32>
    %214 = vector.extract_strided_slice %2 {offsets = [0, 0], sizes = [1, 128], strides = [1, 1]} : vector<8x128xf32> to vector<1x128xf32>
    %215 = vector.broadcast %213 : vector<8x1xf32> to vector<8x128xf32>
    %216 = vector.broadcast %214 : vector<1x128xf32> to vector<8x128xf32>
    %217 = arith.mulf %215, %216 : vector<8x128xf32>
    %218 = arith.addf %211, %217 : vector<8x128xf32>
    %219 = vector.extract_strided_slice %218 {offsets = [0, 1], sizes = [8, 1], strides = [1, 1]} : vector<8x128xf32> to vector<8x1xf32>
    %220 = math.tanh %219 : vector<8x1xf32>
    %221 = vector.extract_strided_slice %2 {offsets = [1, 0], sizes = [1, 128], strides = [1, 1]} : vector<8x128xf32> to vector<1x128xf32>
    %222 = vector.broadcast %220 : vector<8x1xf32> to vector<8x128xf32>
    %223 = vector.broadcast %221 : vector<1x128xf32> to vector<8x128xf32>
    %224 = arith.mulf %222, %223 : vector<8x128xf32>
    %225 = arith.addf %218, %224 : vector<8x128xf32>
    %226 = vector.extract_strided_slice %225 {offsets = [0, 2], sizes = [8, 1], strides = [1, 1]} : vector<8x128xf32> to vector<8x1xf32>
    %227 = math.tanh %226 : vector<8x1xf32>
    %228 = vector.extract_strided_slice %2 {offsets = [2, 0], sizes = [1, 128], strides = [1, 1]} : vector<8x128xf32> to vector<1x128xf32>
    %229 = vector.broadcast %227 : vector<8x1xf32> to vector<8x128xf32>
    %230 = vector.broadcast %228 : vector<1x128xf32> to vector<8x128xf32>
    %231 = arith.mulf %229, %230 : vector<8x128xf32>
    %232 = arith.addf %225, %231 : vector<8x128xf32>
    %233 = vector.extract_strided_slice %232 {offsets = [0, 3], sizes = [8, 1], strides = [1, 1]} : vector<8x128xf32> to vector<8x1xf32>
    %234 = math.tanh %233 : vector<8x1xf32>
    %235 = vector.extract_strided_slice %2 {offsets = [3, 0], sizes = [1, 128], strides = [1, 1]} : vector<8x128xf32> to vector<1x128xf32>
    %236 = vector.broadcast %234 : vector<8x1xf32> to vector<8x128xf32>
    %237 = vector.broadcast %235 : vector<1x128xf32> to vector<8x128xf32>
    %238 = arith.mulf %236, %237 : vector<8x128xf32>
    %239 = arith.addf %232, %238 : vector<8x128xf32>
    %240 = vector.extract_strided_slice %239 {offsets = [0, 4], sizes = [8, 1], strides = [1, 1]} : vector<8x128xf32> to vector<8x1xf32>
    %241 = math.tanh %240 : vector<8x1xf32>
    %242 = vector.extract_strided_slice %2 {offsets = [4, 0], sizes = [1, 128], strides = [1, 1]} : vector<8x128xf32> to vector<1x128xf32>
    %243 = vector.broadcast %241 : vector<8x1xf32> to vector<8x128xf32>
    %244 = vector.broadcast %242 : vector<1x128xf32> to vector<8x128xf32>
    %245 = arith.mulf %243, %244 : vector<8x128xf32>
    %246 = arith.addf %239, %245 : vector<8x128xf32>
    %247 = vector.extract_strided_slice %246 {offsets = [0, 5], sizes = [8, 1], strides = [1, 1]} : vector<8x128xf32> to vector<8x1xf32>
    %248 = math.tanh %247 : vector<8x1xf32>
    %249 = vector.extract_strided_slice %2 {offsets = [5, 0], sizes = [1, 128], strides = [1, 1]} : vector<8x128xf32> to vector<1x128xf32>
    %250 = vector.broadcast %248 : vector<8x1xf32> to vector<8x128xf32>
    %251 = vector.broadcast %249 : vector<1x128xf32> to vector<8x128xf32>
    %252 = arith.mulf %250, %251 : vector<8x128xf32>
    %253 = arith.addf %246, %252 : vector<8x128xf32>
    %254 = vector.extract_strided_slice %253 {offsets = [0, 6], sizes = [8, 1], strides = [1, 1]} : vector<8x128xf32> to vector<8x1xf32>
    %255 = math.tanh %254 : vector<8x1xf32>
    %256 = vector.extract_strided_slice %2 {offsets = [6, 0], sizes = [1, 128], strides = [1, 1]} : vector<8x128xf32> to vector<1x128xf32>
    %257 = vector.broadcast %255 : vector<8x1xf32> to vector<8x128xf32>
    %258 = vector.broadcast %256 : vector<1x128xf32> to vector<8x128xf32>
    %259 = arith.mulf %257, %258 : vector<8x128xf32>
    %260 = arith.addf %253, %259 : vector<8x128xf32>
    %261 = vector.extract_strided_slice %260 {offsets = [0, 7], sizes = [8, 1], strides = [1, 1]} : vector<8x128xf32> to vector<8x1xf32>
    %262 = math.tanh %261 : vector<8x1xf32>
    %263 = vector.extract_strided_slice %2 {offsets = [7, 0], sizes = [1, 128], strides = [1, 1]} : vector<8x128xf32> to vector<1x128xf32>
    %264 = vector.broadcast %262 : vector<8x1xf32> to vector<8x128xf32>
    %265 = vector.broadcast %263 : vector<1x128xf32> to vector<8x128xf32>
    %266 = arith.mulf %264, %265 : vector<8x128xf32>
    %267 = arith.addf %260, %266 : vector<8x128xf32>
    %268 = arith.negf %267 : vector<8x128xf32>
    %269 = math.exp %268 : vector<8x128xf32>
    %cst_35 = arith.constant 1.000000e+00 : f32
    %270 = vector.broadcast %cst_35 : f32 to vector<8x128xf32>
    %271 = arith.addf %270, %269 : vector<8x128xf32>
    %272 = arith.divf %270, %271 : vector<8x128xf32>
    %cst_36 = arith.constant 4.800000e+00 : f32
    %273 = vector.broadcast %cst_36 : f32 to vector<8x128xf32>
    %274 = arith.mulf %273, %272 : vector<8x128xf32>
    %cst_37 = arith.constant 8.000000e+00 : f32
    %275 = vector.broadcast %cst_37 : f32 to vector<8x128xf32>
    %276 = arith.addf %275, %274 : vector<8x128xf32>
    %277 = vector.shape_cast %62 : vector<1x128xi1> to vector<1x128xi1>
    %278 = vector.broadcast %277 : vector<1x128xi1> to vector<8x128xi1>
    %279 = arith.select %278, %276, %267 : vector<8x128xi1>, vector<8x128xf32>
    %c2 = arith.constant 2 : index
    %c0_38 = arith.constant 0 : index
    %c0_39 = arith.constant 0 : index
    %280 = vector.load %arg8[%c2, %c0_38, %c0_39] : memref<8x8x128xf32, #tpu.memory_space<vmem>>, vector<1x8x128xf32>
    %281 = vector.shape_cast %280 : vector<1x8x128xf32> to vector<8x128xf32>
    %282 = vector.shape_cast %279 : vector<8x128xf32> to vector<1x8x128xf32>
    tpu.vector_store %arg8[%c2, %c0_38, %c0_39], %282 {strides = array<i32>} : memref<8x8x128xf32, #tpu.memory_space<vmem>>, vector<1x8x128xf32>,
    %cst_40 = arith.constant dense<0.000000e+00> : vector<8x128xf32>
    %283 = tpu.matmul %267, %0, %cst_40 {dimension_numbers = #tpu.dot_dimension_numbers<[1], [0], [0], [1], [0, 0, 1, 1], [], []>} : vector<8x128xf32>, vector<128x128xf32>, vector<8x128xf32> -> vector<8x128xf32>
    %284 = arith.addf %283, %32 : vector<8x128xf32>
    %285 = vector.extract_strided_slice %284 {offsets = [0, 0], sizes = [8, 1], strides = [1, 1]} : vector<8x128xf32> to vector<8x1xf32>
    %286 = math.tanh %285 : vector<8x1xf32>
    %287 = vector.extract_strided_slice %2 {offsets = [0, 0], sizes = [1, 128], strides = [1, 1]} : vector<8x128xf32> to vector<1x128xf32>
    %288 = vector.broadcast %286 : vector<8x1xf32> to vector<8x128xf32>
    %289 = vector.broadcast %287 : vector<1x128xf32> to vector<8x128xf32>
    %290 = arith.mulf %288, %289 : vector<8x128xf32>
    %291 = arith.addf %284, %290 : vector<8x128xf32>
    %292 = vector.extract_strided_slice %291 {offsets = [0, 1], sizes = [8, 1], strides = [1, 1]} : vector<8x128xf32> to vector<8x1xf32>
    %293 = math.tanh %292 : vector<8x1xf32>
    %294 = vector.extract_strided_slice %2 {offsets = [1, 0], sizes = [1, 128], strides = [1, 1]} : vector<8x128xf32> to vector<1x128xf32>
    %295 = vector.broadcast %293 : vector<8x1xf32> to vector<8x128xf32>
    %296 = vector.broadcast %294 : vector<1x128xf32> to vector<8x128xf32>
    %297 = arith.mulf %295, %296 : vector<8x128xf32>
    %298 = arith.addf %291, %297 : vector<8x128xf32>
    %299 = vector.extract_strided_slice %298 {offsets = [0, 2], sizes = [8, 1], strides = [1, 1]} : vector<8x128xf32> to vector<8x1xf32>
    %300 = math.tanh %299 : vector<8x1xf32>
    %301 = vector.extract_strided_slice %2 {offsets = [2, 0], sizes = [1, 128], strides = [1, 1]} : vector<8x128xf32> to vector<1x128xf32>
    %302 = vector.broadcast %300 : vector<8x1xf32> to vector<8x128xf32>
    %303 = vector.broadcast %301 : vector<1x128xf32> to vector<8x128xf32>
    %304 = arith.mulf %302, %303 : vector<8x128xf32>
    %305 = arith.addf %298, %304 : vector<8x128xf32>
    %306 = vector.extract_strided_slice %305 {offsets = [0, 3], sizes = [8, 1], strides = [1, 1]} : vector<8x128xf32> to vector<8x1xf32>
    %307 = math.tanh %306 : vector<8x1xf32>
    %308 = vector.extract_strided_slice %2 {offsets = [3, 0], sizes = [1, 128], strides = [1, 1]} : vector<8x128xf32> to vector<1x128xf32>
    %309 = vector.broadcast %307 : vector<8x1xf32> to vector<8x128xf32>
    %310 = vector.broadcast %308 : vector<1x128xf32> to vector<8x128xf32>
    %311 = arith.mulf %309, %310 : vector<8x128xf32>
    %312 = arith.addf %305, %311 : vector<8x128xf32>
    %313 = vector.extract_strided_slice %312 {offsets = [0, 4], sizes = [8, 1], strides = [1, 1]} : vector<8x128xf32> to vector<8x1xf32>
    %314 = math.tanh %313 : vector<8x1xf32>
    %315 = vector.extract_strided_slice %2 {offsets = [4, 0], sizes = [1, 128], strides = [1, 1]} : vector<8x128xf32> to vector<1x128xf32>
    %316 = vector.broadcast %314 : vector<8x1xf32> to vector<8x128xf32>
    %317 = vector.broadcast %315 : vector<1x128xf32> to vector<8x128xf32>
    %318 = arith.mulf %316, %317 : vector<8x128xf32>
    %319 = arith.addf %312, %318 : vector<8x128xf32>
    %320 = vector.extract_strided_slice %319 {offsets = [0, 5], sizes = [8, 1], strides = [1, 1]} : vector<8x128xf32> to vector<8x1xf32>
    %321 = math.tanh %320 : vector<8x1xf32>
    %322 = vector.extract_strided_slice %2 {offsets = [5, 0], sizes = [1, 128], strides = [1, 1]} : vector<8x128xf32> to vector<1x128xf32>
    %323 = vector.broadcast %321 : vector<8x1xf32> to vector<8x128xf32>
    %324 = vector.broadcast %322 : vector<1x128xf32> to vector<8x128xf32>
    %325 = arith.mulf %323, %324 : vector<8x128xf32>
    %326 = arith.addf %319, %325 : vector<8x128xf32>
    %327 = vector.extract_strided_slice %326 {offsets = [0, 6], sizes = [8, 1], strides = [1, 1]} : vector<8x128xf32> to vector<8x1xf32>
    %328 = math.tanh %327 : vector<8x1xf32>
    %329 = vector.extract_strided_slice %2 {offsets = [6, 0], sizes = [1, 128], strides = [1, 1]} : vector<8x128xf32> to vector<1x128xf32>
    %330 = vector.broadcast %328 : vector<8x1xf32> to vector<8x128xf32>
    %331 = vector.broadcast %329 : vector<1x128xf32> to vector<8x128xf32>
    %332 = arith.mulf %330, %331 : vector<8x128xf32>
    %333 = arith.addf %326, %332 : vector<8x128xf32>
    %334 = vector.extract_strided_slice %333 {offsets = [0, 7], sizes = [8, 1], strides = [1, 1]} : vector<8x128xf32> to vector<8x1xf32>
    %335 = math.tanh %334 : vector<8x1xf32>
    %336 = vector.extract_strided_slice %2 {offsets = [7, 0], sizes = [1, 128], strides = [1, 1]} : vector<8x128xf32> to vector<1x128xf32>
    %337 = vector.broadcast %335 : vector<8x1xf32> to vector<8x128xf32>
    %338 = vector.broadcast %336 : vector<1x128xf32> to vector<8x128xf32>
    %339 = arith.mulf %337, %338 : vector<8x128xf32>
    %340 = arith.addf %333, %339 : vector<8x128xf32>
    %341 = arith.negf %340 : vector<8x128xf32>
    %342 = math.exp %341 : vector<8x128xf32>
    %cst_41 = arith.constant 1.000000e+00 : f32
    %343 = vector.broadcast %cst_41 : f32 to vector<8x128xf32>
    %344 = arith.addf %343, %342 : vector<8x128xf32>
    %345 = arith.divf %343, %344 : vector<8x128xf32>
    %cst_42 = arith.constant 4.800000e+00 : f32
    %346 = vector.broadcast %cst_42 : f32 to vector<8x128xf32>
    %347 = arith.mulf %346, %345 : vector<8x128xf32>
    %cst_43 = arith.constant 8.000000e+00 : f32
    %348 = vector.broadcast %cst_43 : f32 to vector<8x128xf32>
    %349 = arith.addf %348, %347 : vector<8x128xf32>
    %350 = vector.shape_cast %62 : vector<1x128xi1> to vector<1x128xi1>
    %351 = vector.broadcast %350 : vector<1x128xi1> to vector<8x128xi1>
    %352 = arith.select %351, %349, %340 : vector<8x128xi1>, vector<8x128xf32>
    %c3 = arith.constant 3 : index
    %c0_44 = arith.constant 0 : index
    %c0_45 = arith.constant 0 : index
    %353 = vector.load %arg8[%c3, %c0_44, %c0_45] : memref<8x8x128xf32, #tpu.memory_space<vmem>>, vector<1x8x128xf32>
    %354 = vector.shape_cast %353 : vector<1x8x128xf32> to vector<8x128xf32>
    %355 = vector.shape_cast %352 : vector<8x128xf32> to vector<1x8x128xf32>
    tpu.vector_store %arg8[%c3, %c0_44, %c0_45], %355 {strides = array<i32>} : memref<8x8x128xf32, #tpu.memory_space<vmem>>, vector<1x8x128xf32>,
    %cst_46 = arith.constant dense<0.000000e+00> : vector<8x128xf32>
    %356 = tpu.matmul %340, %0, %cst_46 {dimension_numbers = #tpu.dot_dimension_numbers<[1], [0], [0], [1], [0, 0, 1, 1], [], []>} : vector<8x128xf32>, vector<128x128xf32>, vector<8x128xf32> -> vector<8x128xf32>
    %357 = arith.addf %356, %38 : vector<8x128xf32>
    %358 = vector.extract_strided_slice %357 {offsets = [0, 0], sizes = [8, 1], strides = [1, 1]} : vector<8x128xf32> to vector<8x1xf32>
    %359 = math.tanh %358 : vector<8x1xf32>
    %360 = vector.extract_strided_slice %2 {offsets = [0, 0], sizes = [1, 128], strides = [1, 1]} : vector<8x128xf32> to vector<1x128xf32>
    %361 = vector.broadcast %359 : vector<8x1xf32> to vector<8x128xf32>
    %362 = vector.broadcast %360 : vector<1x128xf32> to vector<8x128xf32>
    %363 = arith.mulf %361, %362 : vector<8x128xf32>
    %364 = arith.addf %357, %363 : vector<8x128xf32>
    %365 = vector.extract_strided_slice %364 {offsets = [0, 1], sizes = [8, 1], strides = [1, 1]} : vector<8x128xf32> to vector<8x1xf32>
    %366 = math.tanh %365 : vector<8x1xf32>
    %367 = vector.extract_strided_slice %2 {offsets = [1, 0], sizes = [1, 128], strides = [1, 1]} : vector<8x128xf32> to vector<1x128xf32>
    %368 = vector.broadcast %366 : vector<8x1xf32> to vector<8x128xf32>
    %369 = vector.broadcast %367 : vector<1x128xf32> to vector<8x128xf32>
    %370 = arith.mulf %368, %369 : vector<8x128xf32>
    %371 = arith.addf %364, %370 : vector<8x128xf32>
    %372 = vector.extract_strided_slice %371 {offsets = [0, 2], sizes = [8, 1], strides = [1, 1]} : vector<8x128xf32> to vector<8x1xf32>
    %373 = math.tanh %372 : vector<8x1xf32>
    %374 = vector.extract_strided_slice %2 {offsets = [2, 0], sizes = [1, 128], strides = [1, 1]} : vector<8x128xf32> to vector<1x128xf32>
    %375 = vector.broadcast %373 : vector<8x1xf32> to vector<8x128xf32>
    %376 = vector.broadcast %374 : vector<1x128xf32> to vector<8x128xf32>
    %377 = arith.mulf %375, %376 : vector<8x128xf32>
    %378 = arith.addf %371, %377 : vector<8x128xf32>
    %379 = vector.extract_strided_slice %378 {offsets = [0, 3], sizes = [8, 1], strides = [1, 1]} : vector<8x128xf32> to vector<8x1xf32>
    %380 = math.tanh %379 : vector<8x1xf32>
    %381 = vector.extract_strided_slice %2 {offsets = [3, 0], sizes = [1, 128], strides = [1, 1]} : vector<8x128xf32> to vector<1x128xf32>
    %382 = vector.broadcast %380 : vector<8x1xf32> to vector<8x128xf32>
    %383 = vector.broadcast %381 : vector<1x128xf32> to vector<8x128xf32>
    %384 = arith.mulf %382, %383 : vector<8x128xf32>
    %385 = arith.addf %378, %384 : vector<8x128xf32>
    %386 = vector.extract_strided_slice %385 {offsets = [0, 4], sizes = [8, 1], strides = [1, 1]} : vector<8x128xf32> to vector<8x1xf32>
    %387 = math.tanh %386 : vector<8x1xf32>
    %388 = vector.extract_strided_slice %2 {offsets = [4, 0], sizes = [1, 128], strides = [1, 1]} : vector<8x128xf32> to vector<1x128xf32>
    %389 = vector.broadcast %387 : vector<8x1xf32> to vector<8x128xf32>
    %390 = vector.broadcast %388 : vector<1x128xf32> to vector<8x128xf32>
    %391 = arith.mulf %389, %390 : vector<8x128xf32>
    %392 = arith.addf %385, %391 : vector<8x128xf32>
    %393 = vector.extract_strided_slice %392 {offsets = [0, 5], sizes = [8, 1], strides = [1, 1]} : vector<8x128xf32> to vector<8x1xf32>
    %394 = math.tanh %393 : vector<8x1xf32>
    %395 = vector.extract_strided_slice %2 {offsets = [5, 0], sizes = [1, 128], strides = [1, 1]} : vector<8x128xf32> to vector<1x128xf32>
    %396 = vector.broadcast %394 : vector<8x1xf32> to vector<8x128xf32>
    %397 = vector.broadcast %395 : vector<1x128xf32> to vector<8x128xf32>
    %398 = arith.mulf %396, %397 : vector<8x128xf32>
    %399 = arith.addf %392, %398 : vector<8x128xf32>
    %400 = vector.extract_strided_slice %399 {offsets = [0, 6], sizes = [8, 1], strides = [1, 1]} : vector<8x128xf32> to vector<8x1xf32>
    %401 = math.tanh %400 : vector<8x1xf32>
    %402 = vector.extract_strided_slice %2 {offsets = [6, 0], sizes = [1, 128], strides = [1, 1]} : vector<8x128xf32> to vector<1x128xf32>
    %403 = vector.broadcast %401 : vector<8x1xf32> to vector<8x128xf32>
    %404 = vector.broadcast %402 : vector<1x128xf32> to vector<8x128xf32>
    %405 = arith.mulf %403, %404 : vector<8x128xf32>
    %406 = arith.addf %399, %405 : vector<8x128xf32>
    %407 = vector.extract_strided_slice %406 {offsets = [0, 7], sizes = [8, 1], strides = [1, 1]} : vector<8x128xf32> to vector<8x1xf32>
    %408 = math.tanh %407 : vector<8x1xf32>
    %409 = vector.extract_strided_slice %2 {offsets = [7, 0], sizes = [1, 128], strides = [1, 1]} : vector<8x128xf32> to vector<1x128xf32>
    %410 = vector.broadcast %408 : vector<8x1xf32> to vector<8x128xf32>
    %411 = vector.broadcast %409 : vector<1x128xf32> to vector<8x128xf32>
    %412 = arith.mulf %410, %411 : vector<8x128xf32>
    %413 = arith.addf %406, %412 : vector<8x128xf32>
    %414 = arith.negf %413 : vector<8x128xf32>
    %415 = math.exp %414 : vector<8x128xf32>
    %cst_47 = arith.constant 1.000000e+00 : f32
    %416 = vector.broadcast %cst_47 : f32 to vector<8x128xf32>
    %417 = arith.addf %416, %415 : vector<8x128xf32>
    %418 = arith.divf %416, %417 : vector<8x128xf32>
    %cst_48 = arith.constant 4.800000e+00 : f32
    %419 = vector.broadcast %cst_48 : f32 to vector<8x128xf32>
    %420 = arith.mulf %419, %418 : vector<8x128xf32>
    %cst_49 = arith.constant 8.000000e+00 : f32
    %421 = vector.broadcast %cst_49 : f32 to vector<8x128xf32>
    %422 = arith.addf %421, %420 : vector<8x128xf32>
    %423 = vector.shape_cast %62 : vector<1x128xi1> to vector<1x128xi1>
    %424 = vector.broadcast %423 : vector<1x128xi1> to vector<8x128xi1>
    %425 = arith.select %424, %422, %413 : vector<8x128xi1>, vector<8x128xf32>
    %c4 = arith.constant 4 : index
    %c0_50 = arith.constant 0 : index
    %c0_51 = arith.constant 0 : index
    %426 = vector.load %arg8[%c4, %c0_50, %c0_51] : memref<8x8x128xf32, #tpu.memory_space<vmem>>, vector<1x8x128xf32>
    %427 = vector.shape_cast %426 : vector<1x8x128xf32> to vector<8x128xf32>
    %428 = vector.shape_cast %425 : vector<8x128xf32> to vector<1x8x128xf32>
    tpu.vector_store %arg8[%c4, %c0_50, %c0_51], %428 {strides = array<i32>} : memref<8x8x128xf32, #tpu.memory_space<vmem>>, vector<1x8x128xf32>,
    %cst_52 = arith.constant dense<0.000000e+00> : vector<8x128xf32>
    %429 = tpu.matmul %413, %0, %cst_52 {dimension_numbers = #tpu.dot_dimension_numbers<[1], [0], [0], [1], [0, 0, 1, 1], [], []>} : vector<8x128xf32>, vector<128x128xf32>, vector<8x128xf32> -> vector<8x128xf32>
    %430 = arith.addf %429, %44 : vector<8x128xf32>
    %431 = vector.extract_strided_slice %430 {offsets = [0, 0], sizes = [8, 1], strides = [1, 1]} : vector<8x128xf32> to vector<8x1xf32>
    %432 = math.tanh %431 : vector<8x1xf32>
    %433 = vector.extract_strided_slice %2 {offsets = [0, 0], sizes = [1, 128], strides = [1, 1]} : vector<8x128xf32> to vector<1x128xf32>
    %434 = vector.broadcast %432 : vector<8x1xf32> to vector<8x128xf32>
    %435 = vector.broadcast %433 : vector<1x128xf32> to vector<8x128xf32>
    %436 = arith.mulf %434, %435 : vector<8x128xf32>
    %437 = arith.addf %430, %436 : vector<8x128xf32>
    %438 = vector.extract_strided_slice %437 {offsets = [0, 1], sizes = [8, 1], strides = [1, 1]} : vector<8x128xf32> to vector<8x1xf32>
    %439 = math.tanh %438 : vector<8x1xf32>
    %440 = vector.extract_strided_slice %2 {offsets = [1, 0], sizes = [1, 128], strides = [1, 1]} : vector<8x128xf32> to vector<1x128xf32>
    %441 = vector.broadcast %439 : vector<8x1xf32> to vector<8x128xf32>
    %442 = vector.broadcast %440 : vector<1x128xf32> to vector<8x128xf32>
    %443 = arith.mulf %441, %442 : vector<8x128xf32>
    %444 = arith.addf %437, %443 : vector<8x128xf32>
    %445 = vector.extract_strided_slice %444 {offsets = [0, 2], sizes = [8, 1], strides = [1, 1]} : vector<8x128xf32> to vector<8x1xf32>
    %446 = math.tanh %445 : vector<8x1xf32>
    %447 = vector.extract_strided_slice %2 {offsets = [2, 0], sizes = [1, 128], strides = [1, 1]} : vector<8x128xf32> to vector<1x128xf32>
    %448 = vector.broadcast %446 : vector<8x1xf32> to vector<8x128xf32>
    %449 = vector.broadcast %447 : vector<1x128xf32> to vector<8x128xf32>
    %450 = arith.mulf %448, %449 : vector<8x128xf32>
    %451 = arith.addf %444, %450 : vector<8x128xf32>
    %452 = vector.extract_strided_slice %451 {offsets = [0, 3], sizes = [8, 1], strides = [1, 1]} : vector<8x128xf32> to vector<8x1xf32>
    %453 = math.tanh %452 : vector<8x1xf32>
    %454 = vector.extract_strided_slice %2 {offsets = [3, 0], sizes = [1, 128], strides = [1, 1]} : vector<8x128xf32> to vector<1x128xf32>
    %455 = vector.broadcast %453 : vector<8x1xf32> to vector<8x128xf32>
    %456 = vector.broadcast %454 : vector<1x128xf32> to vector<8x128xf32>
    %457 = arith.mulf %455, %456 : vector<8x128xf32>
    %458 = arith.addf %451, %457 : vector<8x128xf32>
    %459 = vector.extract_strided_slice %458 {offsets = [0, 4], sizes = [8, 1], strides = [1, 1]} : vector<8x128xf32> to vector<8x1xf32>
    %460 = math.tanh %459 : vector<8x1xf32>
    %461 = vector.extract_strided_slice %2 {offsets = [4, 0], sizes = [1, 128], strides = [1, 1]} : vector<8x128xf32> to vector<1x128xf32>
    %462 = vector.broadcast %460 : vector<8x1xf32> to vector<8x128xf32>
    %463 = vector.broadcast %461 : vector<1x128xf32> to vector<8x128xf32>
    %464 = arith.mulf %462, %463 : vector<8x128xf32>
    %465 = arith.addf %458, %464 : vector<8x128xf32>
    %466 = vector.extract_strided_slice %465 {offsets = [0, 5], sizes = [8, 1], strides = [1, 1]} : vector<8x128xf32> to vector<8x1xf32>
    %467 = math.tanh %466 : vector<8x1xf32>
    %468 = vector.extract_strided_slice %2 {offsets = [5, 0], sizes = [1, 128], strides = [1, 1]} : vector<8x128xf32> to vector<1x128xf32>
    %469 = vector.broadcast %467 : vector<8x1xf32> to vector<8x128xf32>
    %470 = vector.broadcast %468 : vector<1x128xf32> to vector<8x128xf32>
    %471 = arith.mulf %469, %470 : vector<8x128xf32>
    %472 = arith.addf %465, %471 : vector<8x128xf32>
    %473 = vector.extract_strided_slice %472 {offsets = [0, 6], sizes = [8, 1], strides = [1, 1]} : vector<8x128xf32> to vector<8x1xf32>
    %474 = math.tanh %473 : vector<8x1xf32>
    %475 = vector.extract_strided_slice %2 {offsets = [6, 0], sizes = [1, 128], strides = [1, 1]} : vector<8x128xf32> to vector<1x128xf32>
    %476 = vector.broadcast %474 : vector<8x1xf32> to vector<8x128xf32>
    %477 = vector.broadcast %475 : vector<1x128xf32> to vector<8x128xf32>
    %478 = arith.mulf %476, %477 : vector<8x128xf32>
    %479 = arith.addf %472, %478 : vector<8x128xf32>
    %480 = vector.extract_strided_slice %479 {offsets = [0, 7], sizes = [8, 1], strides = [1, 1]} : vector<8x128xf32> to vector<8x1xf32>
    %481 = math.tanh %480 : vector<8x1xf32>
    %482 = vector.extract_strided_slice %2 {offsets = [7, 0], sizes = [1, 128], strides = [1, 1]} : vector<8x128xf32> to vector<1x128xf32>
    %483 = vector.broadcast %481 : vector<8x1xf32> to vector<8x128xf32>
    %484 = vector.broadcast %482 : vector<1x128xf32> to vector<8x128xf32>
    %485 = arith.mulf %483, %484 : vector<8x128xf32>
    %486 = arith.addf %479, %485 : vector<8x128xf32>
    %487 = arith.negf %486 : vector<8x128xf32>
    %488 = math.exp %487 : vector<8x128xf32>
    %cst_53 = arith.constant 1.000000e+00 : f32
    %489 = vector.broadcast %cst_53 : f32 to vector<8x128xf32>
    %490 = arith.addf %489, %488 : vector<8x128xf32>
    %491 = arith.divf %489, %490 : vector<8x128xf32>
    %cst_54 = arith.constant 4.800000e+00 : f32
    %492 = vector.broadcast %cst_54 : f32 to vector<8x128xf32>
    %493 = arith.mulf %492, %491 : vector<8x128xf32>
    %cst_55 = arith.constant 8.000000e+00 : f32
    %494 = vector.broadcast %cst_55 : f32 to vector<8x128xf32>
    %495 = arith.addf %494, %493 : vector<8x128xf32>
    %496 = vector.shape_cast %62 : vector<1x128xi1> to vector<1x128xi1>
    %497 = vector.broadcast %496 : vector<1x128xi1> to vector<8x128xi1>
    %498 = arith.select %497, %495, %486 : vector<8x128xi1>, vector<8x128xf32>
    %c5 = arith.constant 5 : index
    %c0_56 = arith.constant 0 : index
    %c0_57 = arith.constant 0 : index
    %499 = vector.load %arg8[%c5, %c0_56, %c0_57] : memref<8x8x128xf32, #tpu.memory_space<vmem>>, vector<1x8x128xf32>
    %500 = vector.shape_cast %499 : vector<1x8x128xf32> to vector<8x128xf32>
    %501 = vector.shape_cast %498 : vector<8x128xf32> to vector<1x8x128xf32>
    tpu.vector_store %arg8[%c5, %c0_56, %c0_57], %501 {strides = array<i32>} : memref<8x8x128xf32, #tpu.memory_space<vmem>>, vector<1x8x128xf32>,
    %cst_58 = arith.constant dense<0.000000e+00> : vector<8x128xf32>
    %502 = tpu.matmul %486, %0, %cst_58 {dimension_numbers = #tpu.dot_dimension_numbers<[1], [0], [0], [1], [0, 0, 1, 1], [], []>} : vector<8x128xf32>, vector<128x128xf32>, vector<8x128xf32> -> vector<8x128xf32>
    %503 = arith.addf %502, %50 : vector<8x128xf32>
    %504 = vector.extract_strided_slice %503 {offsets = [0, 0], sizes = [8, 1], strides = [1, 1]} : vector<8x128xf32> to vector<8x1xf32>
    %505 = math.tanh %504 : vector<8x1xf32>
    %506 = vector.extract_strided_slice %2 {offsets = [0, 0], sizes = [1, 128], strides = [1, 1]} : vector<8x128xf32> to vector<1x128xf32>
    %507 = vector.broadcast %505 : vector<8x1xf32> to vector<8x128xf32>
    %508 = vector.broadcast %506 : vector<1x128xf32> to vector<8x128xf32>
    %509 = arith.mulf %507, %508 : vector<8x128xf32>
    %510 = arith.addf %503, %509 : vector<8x128xf32>
    %511 = vector.extract_strided_slice %510 {offsets = [0, 1], sizes = [8, 1], strides = [1, 1]} : vector<8x128xf32> to vector<8x1xf32>
    %512 = math.tanh %511 : vector<8x1xf32>
    %513 = vector.extract_strided_slice %2 {offsets = [1, 0], sizes = [1, 128], strides = [1, 1]} : vector<8x128xf32> to vector<1x128xf32>
    %514 = vector.broadcast %512 : vector<8x1xf32> to vector<8x128xf32>
    %515 = vector.broadcast %513 : vector<1x128xf32> to vector<8x128xf32>
    %516 = arith.mulf %514, %515 : vector<8x128xf32>
    %517 = arith.addf %510, %516 : vector<8x128xf32>
    %518 = vector.extract_strided_slice %517 {offsets = [0, 2], sizes = [8, 1], strides = [1, 1]} : vector<8x128xf32> to vector<8x1xf32>
    %519 = math.tanh %518 : vector<8x1xf32>
    %520 = vector.extract_strided_slice %2 {offsets = [2, 0], sizes = [1, 128], strides = [1, 1]} : vector<8x128xf32> to vector<1x128xf32>
    %521 = vector.broadcast %519 : vector<8x1xf32> to vector<8x128xf32>
    %522 = vector.broadcast %520 : vector<1x128xf32> to vector<8x128xf32>
    %523 = arith.mulf %521, %522 : vector<8x128xf32>
    %524 = arith.addf %517, %523 : vector<8x128xf32>
    %525 = vector.extract_strided_slice %524 {offsets = [0, 3], sizes = [8, 1], strides = [1, 1]} : vector<8x128xf32> to vector<8x1xf32>
    %526 = math.tanh %525 : vector<8x1xf32>
    %527 = vector.extract_strided_slice %2 {offsets = [3, 0], sizes = [1, 128], strides = [1, 1]} : vector<8x128xf32> to vector<1x128xf32>
    %528 = vector.broadcast %526 : vector<8x1xf32> to vector<8x128xf32>
    %529 = vector.broadcast %527 : vector<1x128xf32> to vector<8x128xf32>
    %530 = arith.mulf %528, %529 : vector<8x128xf32>
    %531 = arith.addf %524, %530 : vector<8x128xf32>
    %532 = vector.extract_strided_slice %531 {offsets = [0, 4], sizes = [8, 1], strides = [1, 1]} : vector<8x128xf32> to vector<8x1xf32>
    %533 = math.tanh %532 : vector<8x1xf32>
    %534 = vector.extract_strided_slice %2 {offsets = [4, 0], sizes = [1, 128], strides = [1, 1]} : vector<8x128xf32> to vector<1x128xf32>
    %535 = vector.broadcast %533 : vector<8x1xf32> to vector<8x128xf32>
    %536 = vector.broadcast %534 : vector<1x128xf32> to vector<8x128xf32>
    %537 = arith.mulf %535, %536 : vector<8x128xf32>
    %538 = arith.addf %531, %537 : vector<8x128xf32>
    %539 = vector.extract_strided_slice %538 {offsets = [0, 5], sizes = [8, 1], strides = [1, 1]} : vector<8x128xf32> to vector<8x1xf32>
    %540 = math.tanh %539 : vector<8x1xf32>
    %541 = vector.extract_strided_slice %2 {offsets = [5, 0], sizes = [1, 128], strides = [1, 1]} : vector<8x128xf32> to vector<1x128xf32>
    %542 = vector.broadcast %540 : vector<8x1xf32> to vector<8x128xf32>
    %543 = vector.broadcast %541 : vector<1x128xf32> to vector<8x128xf32>
    %544 = arith.mulf %542, %543 : vector<8x128xf32>
    %545 = arith.addf %538, %544 : vector<8x128xf32>
    %546 = vector.extract_strided_slice %545 {offsets = [0, 6], sizes = [8, 1], strides = [1, 1]} : vector<8x128xf32> to vector<8x1xf32>
    %547 = math.tanh %546 : vector<8x1xf32>
    %548 = vector.extract_strided_slice %2 {offsets = [6, 0], sizes = [1, 128], strides = [1, 1]} : vector<8x128xf32> to vector<1x128xf32>
    %549 = vector.broadcast %547 : vector<8x1xf32> to vector<8x128xf32>
    %550 = vector.broadcast %548 : vector<1x128xf32> to vector<8x128xf32>
    %551 = arith.mulf %549, %550 : vector<8x128xf32>
    %552 = arith.addf %545, %551 : vector<8x128xf32>
    %553 = vector.extract_strided_slice %552 {offsets = [0, 7], sizes = [8, 1], strides = [1, 1]} : vector<8x128xf32> to vector<8x1xf32>
    %554 = math.tanh %553 : vector<8x1xf32>
    %555 = vector.extract_strided_slice %2 {offsets = [7, 0], sizes = [1, 128], strides = [1, 1]} : vector<8x128xf32> to vector<1x128xf32>
    %556 = vector.broadcast %554 : vector<8x1xf32> to vector<8x128xf32>
    %557 = vector.broadcast %555 : vector<1x128xf32> to vector<8x128xf32>
    %558 = arith.mulf %556, %557 : vector<8x128xf32>
    %559 = arith.addf %552, %558 : vector<8x128xf32>
    %560 = arith.negf %559 : vector<8x128xf32>
    %561 = math.exp %560 : vector<8x128xf32>
    %cst_59 = arith.constant 1.000000e+00 : f32
    %562 = vector.broadcast %cst_59 : f32 to vector<8x128xf32>
    %563 = arith.addf %562, %561 : vector<8x128xf32>
    %564 = arith.divf %562, %563 : vector<8x128xf32>
    %cst_60 = arith.constant 4.800000e+00 : f32
    %565 = vector.broadcast %cst_60 : f32 to vector<8x128xf32>
    %566 = arith.mulf %565, %564 : vector<8x128xf32>
    %cst_61 = arith.constant 8.000000e+00 : f32
    %567 = vector.broadcast %cst_61 : f32 to vector<8x128xf32>
    %568 = arith.addf %567, %566 : vector<8x128xf32>
    %569 = vector.shape_cast %62 : vector<1x128xi1> to vector<1x128xi1>
    %570 = vector.broadcast %569 : vector<1x128xi1> to vector<8x128xi1>
    %571 = arith.select %570, %568, %559 : vector<8x128xi1>, vector<8x128xf32>
    %c6 = arith.constant 6 : index
    %c0_62 = arith.constant 0 : index
    %c0_63 = arith.constant 0 : index
    %572 = vector.load %arg8[%c6, %c0_62, %c0_63] : memref<8x8x128xf32, #tpu.memory_space<vmem>>, vector<1x8x128xf32>
    %573 = vector.shape_cast %572 : vector<1x8x128xf32> to vector<8x128xf32>
    %574 = vector.shape_cast %571 : vector<8x128xf32> to vector<1x8x128xf32>
    tpu.vector_store %arg8[%c6, %c0_62, %c0_63], %574 {strides = array<i32>} : memref<8x8x128xf32, #tpu.memory_space<vmem>>, vector<1x8x128xf32>,
    %cst_64 = arith.constant dense<0.000000e+00> : vector<8x128xf32>
    %575 = tpu.matmul %559, %0, %cst_64 {dimension_numbers = #tpu.dot_dimension_numbers<[1], [0], [0], [1], [0, 0, 1, 1], [], []>} : vector<8x128xf32>, vector<128x128xf32>, vector<8x128xf32> -> vector<8x128xf32>
    %576 = arith.addf %575, %56 : vector<8x128xf32>
    %577 = vector.extract_strided_slice %576 {offsets = [0, 0], sizes = [8, 1], strides = [1, 1]} : vector<8x128xf32> to vector<8x1xf32>
    %578 = math.tanh %577 : vector<8x1xf32>
    %579 = vector.extract_strided_slice %2 {offsets = [0, 0], sizes = [1, 128], strides = [1, 1]} : vector<8x128xf32> to vector<1x128xf32>
    %580 = vector.broadcast %578 : vector<8x1xf32> to vector<8x128xf32>
    %581 = vector.broadcast %579 : vector<1x128xf32> to vector<8x128xf32>
    %582 = arith.mulf %580, %581 : vector<8x128xf32>
    %583 = arith.addf %576, %582 : vector<8x128xf32>
    %584 = vector.extract_strided_slice %583 {offsets = [0, 1], sizes = [8, 1], strides = [1, 1]} : vector<8x128xf32> to vector<8x1xf32>
    %585 = math.tanh %584 : vector<8x1xf32>
    %586 = vector.extract_strided_slice %2 {offsets = [1, 0], sizes = [1, 128], strides = [1, 1]} : vector<8x128xf32> to vector<1x128xf32>
    %587 = vector.broadcast %585 : vector<8x1xf32> to vector<8x128xf32>
    %588 = vector.broadcast %586 : vector<1x128xf32> to vector<8x128xf32>
    %589 = arith.mulf %587, %588 : vector<8x128xf32>
    %590 = arith.addf %583, %589 : vector<8x128xf32>
    %591 = vector.extract_strided_slice %590 {offsets = [0, 2], sizes = [8, 1], strides = [1, 1]} : vector<8x128xf32> to vector<8x1xf32>
    %592 = math.tanh %591 : vector<8x1xf32>
    %593 = vector.extract_strided_slice %2 {offsets = [2, 0], sizes = [1, 128], strides = [1, 1]} : vector<8x128xf32> to vector<1x128xf32>
    %594 = vector.broadcast %592 : vector<8x1xf32> to vector<8x128xf32>
    %595 = vector.broadcast %593 : vector<1x128xf32> to vector<8x128xf32>
    %596 = arith.mulf %594, %595 : vector<8x128xf32>
    %597 = arith.addf %590, %596 : vector<8x128xf32>
    %598 = vector.extract_strided_slice %597 {offsets = [0, 3], sizes = [8, 1], strides = [1, 1]} : vector<8x128xf32> to vector<8x1xf32>
    %599 = math.tanh %598 : vector<8x1xf32>
    %600 = vector.extract_strided_slice %2 {offsets = [3, 0], sizes = [1, 128], strides = [1, 1]} : vector<8x128xf32> to vector<1x128xf32>
    %601 = vector.broadcast %599 : vector<8x1xf32> to vector<8x128xf32>
    %602 = vector.broadcast %600 : vector<1x128xf32> to vector<8x128xf32>
    %603 = arith.mulf %601, %602 : vector<8x128xf32>
    %604 = arith.addf %597, %603 : vector<8x128xf32>
    %605 = vector.extract_strided_slice %604 {offsets = [0, 4], sizes = [8, 1], strides = [1, 1]} : vector<8x128xf32> to vector<8x1xf32>
    %606 = math.tanh %605 : vector<8x1xf32>
    %607 = vector.extract_strided_slice %2 {offsets = [4, 0], sizes = [1, 128], strides = [1, 1]} : vector<8x128xf32> to vector<1x128xf32>
    %608 = vector.broadcast %606 : vector<8x1xf32> to vector<8x128xf32>
    %609 = vector.broadcast %607 : vector<1x128xf32> to vector<8x128xf32>
    %610 = arith.mulf %608, %609 : vector<8x128xf32>
    %611 = arith.addf %604, %610 : vector<8x128xf32>
    %612 = vector.extract_strided_slice %611 {offsets = [0, 5], sizes = [8, 1], strides = [1, 1]} : vector<8x128xf32> to vector<8x1xf32>
    %613 = math.tanh %612 : vector<8x1xf32>
    %614 = vector.extract_strided_slice %2 {offsets = [5, 0], sizes = [1, 128], strides = [1, 1]} : vector<8x128xf32> to vector<1x128xf32>
    %615 = vector.broadcast %613 : vector<8x1xf32> to vector<8x128xf32>
    %616 = vector.broadcast %614 : vector<1x128xf32> to vector<8x128xf32>
    %617 = arith.mulf %615, %616 : vector<8x128xf32>
    %618 = arith.addf %611, %617 : vector<8x128xf32>
    %619 = vector.extract_strided_slice %618 {offsets = [0, 6], sizes = [8, 1], strides = [1, 1]} : vector<8x128xf32> to vector<8x1xf32>
    %620 = math.tanh %619 : vector<8x1xf32>
    %621 = vector.extract_strided_slice %2 {offsets = [6, 0], sizes = [1, 128], strides = [1, 1]} : vector<8x128xf32> to vector<1x128xf32>
    %622 = vector.broadcast %620 : vector<8x1xf32> to vector<8x128xf32>
    %623 = vector.broadcast %621 : vector<1x128xf32> to vector<8x128xf32>
    %624 = arith.mulf %622, %623 : vector<8x128xf32>
    %625 = arith.addf %618, %624 : vector<8x128xf32>
    %626 = vector.extract_strided_slice %625 {offsets = [0, 7], sizes = [8, 1], strides = [1, 1]} : vector<8x128xf32> to vector<8x1xf32>
    %627 = math.tanh %626 : vector<8x1xf32>
    %628 = vector.extract_strided_slice %2 {offsets = [7, 0], sizes = [1, 128], strides = [1, 1]} : vector<8x128xf32> to vector<1x128xf32>
    %629 = vector.broadcast %627 : vector<8x1xf32> to vector<8x128xf32>
    %630 = vector.broadcast %628 : vector<1x128xf32> to vector<8x128xf32>
    %631 = arith.mulf %629, %630 : vector<8x128xf32>
    %632 = arith.addf %625, %631 : vector<8x128xf32>
    %633 = arith.negf %632 : vector<8x128xf32>
    %634 = math.exp %633 : vector<8x128xf32>
    %cst_65 = arith.constant 1.000000e+00 : f32
    %635 = vector.broadcast %cst_65 : f32 to vector<8x128xf32>
    %636 = arith.addf %635, %634 : vector<8x128xf32>
    %637 = arith.divf %635, %636 : vector<8x128xf32>
    %cst_66 = arith.constant 4.800000e+00 : f32
    %638 = vector.broadcast %cst_66 : f32 to vector<8x128xf32>
    %639 = arith.mulf %638, %637 : vector<8x128xf32>
    %cst_67 = arith.constant 8.000000e+00 : f32
    %640 = vector.broadcast %cst_67 : f32 to vector<8x128xf32>
    %641 = arith.addf %640, %639 : vector<8x128xf32>
    %642 = vector.shape_cast %62 : vector<1x128xi1> to vector<1x128xi1>
    %643 = vector.broadcast %642 : vector<1x128xi1> to vector<8x128xi1>
    %644 = arith.select %643, %641, %632 : vector<8x128xi1>, vector<8x128xf32>
    %c7 = arith.constant 7 : index
    %c0_68 = arith.constant 0 : index
    %c0_69 = arith.constant 0 : index
    %645 = vector.load %arg8[%c7, %c0_68, %c0_69] : memref<8x8x128xf32, #tpu.memory_space<vmem>>, vector<1x8x128xf32>
    %646 = vector.shape_cast %645 : vector<1x8x128xf32> to vector<8x128xf32>
    %647 = vector.shape_cast %644 : vector<8x128xf32> to vector<1x8x128xf32>
    tpu.vector_store %arg8[%c7, %c0_68, %c0_69], %647 {strides = array<i32>} : memref<8x8x128xf32, #tpu.memory_space<vmem>>, vector<1x8x128xf32>,
    return
  }
  func.func @transform_0(%arg0: i32) -> (i32, i32) {
    %c0_i32 = arith.constant 0 : i32
    %c0_i32_0 = arith.constant 0 : i32
    %c0_i32_1 = arith.constant 0 : i32
    return %c0_i32, %c0_i32_0 : i32, i32
  }
  func.func @transform_1(%arg0: i32) -> (i32, i32, i32) {
    %c0_i32 = arith.constant 0 : i32
    %c0_i32_0 = arith.constant 0 : i32
    %c0_i32_1 = arith.constant 0 : i32
    return %c0_i32, %arg0, %c0_i32_0 : i32, i32, i32
  }
  func.func @transform_2(%arg0: i32) -> (i32, i32) {
    %c0_i32 = arith.constant 0 : i32
    %c0_i32_0 = arith.constant 0 : i32
    return %arg0, %c0_i32 : i32, i32
  }
  func.func @transform_3(%arg0: i32) -> (i32, i32) {
    %c0_i32 = arith.constant 0 : i32
    %c0_i32_0 = arith.constant 0 : i32
    %c0_i32_1 = arith.constant 0 : i32
    return %c0_i32, %c0_i32_0 : i32, i32
  }
  func.func @transform_4(%arg0: i32) -> (i32, i32) {
    %c0_i32 = arith.constant 0 : i32
    %c0_i32_0 = arith.constant 0 : i32
    %c0_i32_1 = arith.constant 0 : i32
    return %c0_i32, %c0_i32_0 : i32, i32
  }
  func.func @transform_5(%arg0: i32) -> (i32, i32) {
    %c0_i32 = arith.constant 0 : i32
    %c0_i32_0 = arith.constant 0 : i32
    %c0_i32_1 = arith.constant 0 : i32
    return %c0_i32, %c0_i32_0 : i32, i32
  }
  func.func @transform_6(%arg0: i32) -> (i32, i32) {
    %c0_i32 = arith.constant 0 : i32
    %c0_i32_0 = arith.constant 0 : i32
    %c0_i32_1 = arith.constant 0 : i32
    return %c0_i32, %c0_i32_0 : i32, i32
  }
  func.func @transform_7(%arg0: i32) -> (i32, i32, i32) {
    %c0_i32 = arith.constant 0 : i32
    %c0_i32_0 = arith.constant 0 : i32
    %c0_i32_1 = arith.constant 0 : i32
    return %c0_i32, %arg0, %c0_i32_0 : i32, i32, i32
  }
}

</mosaic_0001>

<llo_original>
// kernel: rollout.1
$region0: #{rollout.1}
  #allocation0 [shape = 'u32[]', space=smem, size = 0x4, offset = 0x4, fixed_abs, tag = 'smem constant byte address 0x4 - core index']
  #allocation1 [shape = 'u32[72,128]{1,0:T(1,128)}', space=vmem, size = 0x9000, scoped, tag = 'internal scratch']
  %s0 = inlined_call_operand.vmem [shape: f32[8,1], index: 0, kind: input, shape index: {}]
  %s1 = inlined_call_operand.vmem [shape: f32[8,16,8], index: 1, kind: input, shape index: {}]
  %s2 = inlined_call_operand.vmem [shape: f32[16,128], index: 2, kind: input, shape index: {}]
  %s3 = inlined_call_operand.vmem [shape: f32[128,128], index: 3, kind: input, shape index: {}]
  %s4 = inlined_call_operand.vmem [shape: f32[8,128], index: 4, kind: input, shape index: {}]
  %s5 = inlined_call_operand.vmem [shape: f32[8,128], index: 5, kind: input, shape index: {}]
  %s6 = inlined_call_operand.vmem [shape: f32[1,128], index: 6, kind: input, shape index: {}]
  %s7 = inlined_call_operand.vmem [shape: f32[8,16,128], index: 7, kind: output, shape index: {}]
  %s8 = sld [smem:[#allocation0]]
  $region133: #{rollout.1} parent=0
    _
  %s10 = ssub.s32 1, %s8
  %s11 = scalar_select 0, %s10, %s8
  $region1: #{rollout.1} parent=0
    #allocation2 [shape = 'u8[65536]{0}', space=vmem, size = 0x10000, scoped, tag = 'input window, operand 1']
    #allocation3 [shape = 'u8[65536]{0}', space=vmem, size = 0x10000, scoped, tag = 'output window, operand 0']
    loop: start=0, step=1, limit=4
    $region2: #{rollout.1} parent=1 // loop_pre_header
      _
    $region3: #{rollout.1} parent=1 // loop_header
      %s13 = sphi 0, %s17
      %p14 = scmp.ge.s32.totalorder %s13, 4
      %s21 = sphi 0, %s21
      %s23 = sphi 0, %s21
      %s24 = sphi 0, %s23
      %s38 = sphi 0, %s24
      %s44 = sphi 0, %s46
      %s47 = sphi 0, %s44
      %s48 = sphi 0, %s47
      %s64 = sphi 0, %s48
      %s70 = sphi 0, %s72
      %s73 = sphi 0, %s70
      %s74 = sphi 0, %s73
      %s90 = sphi 0, %s74
      %s94 = sphi 0, %s94
      %s96 = sphi 0, %s94
      %s97 = sphi 0, %s96
      %s111 = sphi 0, %s97
      %s115 = sphi 0, %s115
      %s117 = sphi 0, %s115
      %s118 = sphi 0, %s117
      %s132 = sphi 0, %s118
      %s136 = sphi 0, %s136
      %s138 = sphi 0, %s136
      %s139 = sphi 0, %s138
      %s153 = sphi 0, %s139
      %s157 = sphi 0, %s157
      %s159 = sphi 0, %s157
      %s160 = sphi 0, %s159
      %s174 = sphi 0, %s160
      %s180 = sphi 0, %s182
      %s183 = sphi 0, %s180
      %s184 = sphi 0, %s183
      %s200 = sphi 0, %s184
    $region4: #{rollout.1} parent=1 // loop_header_branch
      %16 = sbr.rel (%p14) target = $region8
    $region5: #{rollout.1} parent=1 // loop_body
      %s18 = ssub.s32 %s13, 1
      %s19 = ssub.s32 %s13, 2
      %s20 = sadd.s32 %s13, 1
      %s22 = sadd.s32 %s21, 1
      %p25 = scmp.eq.s32.totalorder %s13, 1
      %p26 = scmp.ne.s32.totalorder %s21, %s23
      %p27 = scmp.eq.s32.totalorder %s13, 0
      %p28 = por %p26, %p27
      %p29 = scmp.ne.s32.totalorder %s21, %s23
      %p30 = scmp.eq.s32.totalorder %s18, 1
      %p31 = por %p29, %p30
      %p32 = scmp.ne.s32.totalorder %s23, %s24
      %p33 = scmp.eq.s32.totalorder %s18, 0
      %p34 = por %p32, %p33
      %p35 = scmp.ne.s32.totalorder %s23, %s24
      %p36 = scmp.eq.s32.totalorder %s19, 1
      %p37 = por %p35, %p36
      %p39 = scmp.ne.s32.totalorder %s24, %s38
      %p40 = scmp.eq.s32.totalorder %s19, 0
      %p41 = por %p39, %p40
      %s42 = ssub.s32 %s13, %s20
      %p43 = scmp.eq.s32.totalorder %s42, 0
      %s45 = sadd.s32 %s44, 1
      %s46 = scalar_select %p43, %s44, %s45
      %p49 = pneg %p43
      %p50 = scmp.eq.s32.totalorder %s13, 1
      %p51 = por %p49, %p50
      %p52 = scmp.ne.s32.totalorder %s44, %s47
      %p53 = scmp.eq.s32.totalorder %s13, 0
      %p54 = por %p52, %p53
      %p55 = scmp.ne.s32.totalorder %s44, %s47
      %p56 = scmp.eq.s32.totalorder %s18, 1
      %p57 = por %p55, %p56
      %p58 = scmp.ne.s32.totalorder %s47, %s48
      %p59 = scmp.eq.s32.totalorder %s18, 0
      %p60 = por %p58, %p59
      %p61 = scmp.ne.s32.totalorder %s47, %s48
      %p62 = scmp.eq.s32.totalorder %s19, 1
      %p63 = por %p61, %p62
      %p65 = scmp.ne.s32.totalorder %s48, %s64
      %p66 = scmp.eq.s32.totalorder %s19, 0
      %p67 = por %p65, %p66
      %s68 = ssub.s32 %s13, %s20
      %p69 = scmp.eq.s32.totalorder %s68, 0
      %s71 = sadd.s32 %s70, 1
      %s72 = scalar_select %p69, %s70, %s71
      %p75 = pneg %p69
      %p76 = scmp.eq.s32.totalorder %s13, 1
      %p77 = por %p75, %p76
      %p78 = scmp.ne.s32.totalorder %s70, %s73
      %p79 = scmp.eq.s32.totalorder %s13, 0
      %p80 = por %p78, %p79
      %p81 = scmp.ne.s32.totalorder %s70, %s73
      %p82 = scmp.eq.s32.totalorder %s18, 1
      %p83 = por %p81, %p82
      %p84 = scmp.ne.s32.totalorder %s73, %s74
      %p85 = scmp.eq.s32.totalorder %s18, 0
      %p86 = por %p84, %p85
      %p87 = scmp.ne.s32.totalorder %s73, %s74
      %p88 = scmp.eq.s32.totalorder %s19, 1
      %p89 = por %p87, %p88
      %p91 = scmp.ne.s32.totalorder %s74, %s90
      %p92 = scmp.eq.s32.totalorder %s19, 0
      %p93 = por %p91, %p92
      %s95 = sadd.s32 %s94, 1
      %p98 = scmp.eq.s32.totalorder %s13, 1
      %p99 = scmp.ne.s32.totalorder %s94, %s96
      %p100 = scmp.eq.s32.totalorder %s13, 0
      %p101 = por %p99, %p100
      %p102 = scmp.ne.s32.totalorder %s94, %s96
      %p103 = scmp.eq.s32.totalorder %s18, 1
      %p104 = por %p102, %p103
      %p105 = scmp.ne.s32.totalorder %s96, %s97
      %p106 = scmp.eq.s32.totalorder %s18, 0
      %p107 = por %p105, %p106
      %p108 = scmp.ne.s32.totalorder %s96, %s97
      %p109 = scmp.eq.s32.totalorder %s19, 1
      %p110 = por %p108, %p109
      %p112 = scmp.ne.s32.totalorder %s97, %s111
      %p113 = scmp.eq.s32.totalorder %s19, 0
      %p114 = por %p112, %p113
      %s116 = sadd.s32 %s115, 1
      %p119 = scmp.eq.s32.totalorder %s13, 1
      %p120 = scmp.ne.s32.totalorder %s115, %s117
      %p121 = scmp.eq.s32.totalorder %s13, 0
      %p122 = por %p120, %p121
      %p123 = scmp.ne.s32.totalorder %s115, %s117
      %p124 = scmp.eq.s32.totalorder %s18, 1
      %p125 = por %p123, %p124
      %p126 = scmp.ne.s32.totalorder %s117, %s118
      %p127 = scmp.eq.s32.totalorder %s18, 0
      %p128 = por %p126, %p127
      %p129 = scmp.ne.s32.totalorder %s117, %s118
      %p130 = scmp.eq.s32.totalorder %s19, 1
      %p131 = por %p129, %p130
      %p133 = scmp.ne.s32.totalorder %s118, %s132
      %p134 = scmp.eq.s32.totalorder %s19, 0
      %p135 = por %p133, %p134
      %s137 = sadd.s32 %s136, 1
      %p140 = scmp.eq.s32.totalorder %s13, 1
      %p141 = scmp.ne.s32.totalorder %s136, %s138
      %p142 = scmp.eq.s32.totalorder %s13, 0
      %p143 = por %p141, %p142
      %p144 = scmp.ne.s32.totalorder %s136, %s138
      %p145 = scmp.eq.s32.totalorder %s18, 1
      %p146 = por %p144, %p145
      %p147 = scmp.ne.s32.totalorder %s138, %s139
      %p148 = scmp.eq.s32.totalorder %s18, 0
      %p149 = por %p147, %p148
      %p150 = scmp.ne.s32.totalorder %s138, %s139
      %p151 = scmp.eq.s32.totalorder %s19, 1
      %p152 = por %p150, %p151
      %p154 = scmp.ne.s32.totalorder %s139, %s153
      %p155 = scmp.eq.s32.totalorder %s19, 0
      %p156 = por %p154, %p155
      %s158 = sadd.s32 %s157, 1
      %p161 = scmp.eq.s32.totalorder %s13, 1
      %p162 = scmp.ne.s32.totalorder %s157, %s159
      %p163 = scmp.eq.s32.totalorder %s13, 0
      %p164 = por %p162, %p163
      %p165 = scmp.ne.s32.totalorder %s157, %s159
      %p166 = scmp.eq.s32.totalorder %s18, 1
      %p167 = por %p165, %p166
      %p168 = scmp.ne.s32.totalorder %s159, %s160
      %p169 = scmp.eq.s32.totalorder %s18, 0
      %p170 = por %p168, %p169
      %p171 = scmp.ne.s32.totalorder %s159, %s160
      %p172 = scmp.eq.s32.totalorder %s19, 1
      %p173 = por %p171, %p172
      %p175 = scmp.ne.s32.totalorder %s160, %s174
      %p176 = scmp.eq.s32.totalorder %s19, 0
      %p177 = por %p175, %p176
      %s178 = ssub.s32 %s13, %s20
      %p179 = scmp.eq.s32.totalorder %s178, 0
      %s181 = sadd.s32 %s180, 1
      %s182 = scalar_select %p179, %s180, %s181
      %p185 = pneg %p179
      %p186 = scmp.eq.s32.totalorder %s13, 1
      %p187 = por %p185, %p186
      %p188 = scmp.ne.s32.totalorder %s180, %s183
      %p189 = scmp.eq.s32.totalorder %s13, 0
      %p190 = por %p188, %p189
      %p191 = scmp.ne.s32.totalorder %s180, %s183
      %p192 = scmp.eq.s32.totalorder %s18, 1
      %p193 = por %p191, %p192
      %p194 = scmp.ne.s32.totalorder %s183, %s184
      %p195 = scmp.eq.s32.totalorder %s18, 0
      %p196 = por %p194, %p195
      %p197 = scmp.ne.s32.totalorder %s183, %s184
      %p198 = scmp.eq.s32.totalorder %s19, 1
      %p199 = por %p197, %p198
      %p201 = scmp.ne.s32.totalorder %s184, %s200
      %p202 = scmp.eq.s32.totalorder %s19, 0
      %p203 = por %p201, %p202
      %p204 = scmp.le.s32.totalorder 1, %s13
      %p205 = scmp.lt.s32.totalorder %s13, 3
      %p206 = pnand %p204, %p205
      %p207 = pneg %p206
      // Predicated region
      $region9: #{rollout.1} parent=5 // pred_check
        _
      $region10: #{rollout.1} parent=5 // pred_check_branch
        %209 = sbr.rel (%p206) target = $region12
      $region11: #{rollout.1} parent=5 // pred_region
        %s210 = ssub.s32 %s13, 1
        // Predicated region
        $region13: #{rollout.1} parent=11 // pred_check
          %p211 = pneg %p34
        $region14: #{rollout.1} parent=11 // pred_check_branch
          %213 = sbr.rel (%p211) target = $region16
        $region15: #{rollout.1} parent=11 // pred_region
          _
        $region16: #{rollout.1} parent=11 // pred_fallthru
          _
        // Predicated region
        $region17: #{rollout.1} parent=11 // pred_check
          %p214 = pneg %p107
        $region18: #{rollout.1} parent=11 // pred_check_branch
          %216 = sbr.rel (%p214) target = $region20
        $region19: #{rollout.1} parent=11 // pred_region
          _
        $region20: #{rollout.1} parent=11 // pred_fallthru
          _
        // Predicated region
        $region21: #{rollout.1} parent=11 // pred_check
          %p217 = pneg %p128
        $region22: #{rollout.1} parent=11 // pred_check_branch
          %219 = sbr.rel (%p217) target = $region24
        $region23: #{rollout.1} parent=11 // pred_region
          _
        $region24: #{rollout.1} parent=11 // pred_fallthru
          _
        // Predicated region
        $region25: #{rollout.1} parent=11 // pred_check
          %p220 = pneg %p149
        $region26: #{rollout.1} parent=11 // pred_check_branch
          %222 = sbr.rel (%p220) target = $region28
        $region27: #{rollout.1} parent=11 // pred_region
          _
        $region28: #{rollout.1} parent=11 // pred_fallthru
          _
        // Predicated region
        $region29: #{rollout.1} parent=11 // pred_check
          %p223 = pneg %p170
        $region30: #{rollout.1} parent=11 // pred_check_branch
          %225 = sbr.rel (%p223) target = $region32
        $region31: #{rollout.1} parent=11 // pred_region
          _
        $region32: #{rollout.1} parent=11 // pred_fallthru
          _
      $region12: #{rollout.1} parent=5 // pred_fallthru
        _
      %p226 = scmp.lt.s32.totalorder %s13, 2
      // Predicated region
      $region33: #{rollout.1} parent=5 // pred_check
        %p227 = pneg %p226
      $region34: #{rollout.1} parent=5 // pred_check_branch
        %229 = sbr.rel (%p227) target = $region36
      $region35: #{rollout.1} parent=5 // pred_region
        // Predicated region
        $region37: #{rollout.1} parent=35 // pred_check
          %p230 = pneg %p54
        $region38: #{rollout.1} parent=35 // pred_check_branch
          %232 = sbr.rel (%p230) target = $region40
        $region39: #{rollout.1} parent=35 // pred_region
          %s233 = sand.u32 %s44, 1
          %s234 = sand.u32 %s44, 1
          %s235 = smul.addr %s234, 64
          %s236 = scalar_lea.vmem [#allocation2], %s235
          %s237 = smul.addr %s13, 8
          %s238 = scalar_lea.vmem %s1, %s237
          // Predicated region
          $region41: #{rollout.1} parent=39 // pred_check
            _
          $region42: #{rollout.1} parent=39 // pred_check_branch
            %240 = sbr.rel (0) target = $region44
          $region43: #{rollout.1} parent=39 // pred_region
            // Predicated region
            $region45: #{rollout.1} parent=43 // pred_check
              _
            $region46: #{rollout.1} parent=43 // pred_check_branch
              %242 = sbr.rel (0) target = $region48
            $region47: #{rollout.1} parent=43 // pred_region
              // Predicated region
              $region60: #{rollout.1} parent=47 // pred_check
                _
              $region61: #{rollout.1} parent=47 // pred_check_branch
                %272 = sbr.rel (0) target = $region63
              $region62: #{rollout.1} parent=47 // pred_region
                loop: start=0, step=1, limit=1
                $region64: #{rollout.1} parent=62 // loop_pre_header
                  _
                $region65: #{rollout.1} parent=62 // loop_header
                  %s274 = sphi 0, %s278
                  %p275 = scmp.ge.s32.totalorder %s274, 1
                  %s279 = sphi %s238, %s238
                  %s280 = sphi %s236, %s236
                $region66: #{rollout.1} parent=62 // loop_header_branch
                  %277 = sbr.rel (%p275) target = $region70
                $region67: #{rollout.1} parent=62 // loop_body
                  %v281 = vld [vmem:[%s279] sm:$0xff]
                  %282 = vst [vmem:[%s280] sm:$0xff] %v281
                  %v283 = vld [vmem:[%s279 + $0x10] sm:$0xff]
                  %284 = vst [vmem:[%s280 + $0x8] sm:$0xff] %v283
                  %v285 = vld [vmem:[%s279 + $0x20] sm:$0xff]
                  %286 = vst [vmem:[%s280 + $0x10] sm:$0xff] %v285
                  %v287 = vld [vmem:[%s279 + $0x30] sm:$0xff]
                  %288 = vst [vmem:[%s280 + $0x18] sm:$0xff] %v287
                  %v289 = vld [vmem:[%s279 + $0x40] sm:$0xff]
                  %290 = vst [vmem:[%s280 + $0x20] sm:$0xff] %v289
                  %v291 = vld [vmem:[%s279 + $0x50] sm:$0xff]
                  %292 = vst [vmem:[%s280 + $0x28] sm:$0xff] %v291
                  %v293 = vld [vmem:[%s279 + $0x60] sm:$0xff]
                  %294 = vst [vmem:[%s280 + $0x30] sm:$0xff] %v293
                  %v295 = vld [vmem:[%s279 + $0x70] sm:$0xff]
                  %296 = vst [vmem:[%s280 + $0x38] sm:$0xff] %v295
                $region68: #{rollout.1} parent=62 // loop_footer
                  %s278 = sadd.s32 1, %s274
                $region69: #{rollout.1} parent=62 // loop_footer_branch
                  %273 = sbr.rel target = $region65
                $region70: #{rollout.1} parent=62 // loop_exit
                  _
              $region63: #{rollout.1} parent=47 // pred_fallthru
                _
              // Predicated region
              $region71: #{rollout.1} parent=47 // pred_check
                _
              $region72: #{rollout.1} parent=47 // pred_check_branch
                %298 = sbr.rel target = $region74
              $region73: #{rollout.1} parent=47 // pred_region
                _
              $region74: #{rollout.1} parent=47 // pred_fallthru
                _
            $region48: #{rollout.1} parent=43 // pred_fallthru
              _
            // Predicated region
            $region49: #{rollout.1} parent=43 // pred_check
              _
            $region50: #{rollout.1} parent=43 // pred_check_branch
              %244 = sbr.rel target = $region52
            $region51: #{rollout.1} parent=43 // pred_region
              %s246 = ssub.s32 256, 1
              loop: start=0, step=1, limit=1
              $region53: #{rollout.1} parent=51 // loop_pre_header
                _
              $region54: #{rollout.1} parent=51 // loop_header
                %s248 = sphi 0, %s252
                %p249 = scmp.ge.s32.totalorder %s248, 1
                %s253 = sphi %s238, %s238
                %s254 = sphi %s236, %s236
              $region55: #{rollout.1} parent=51 // loop_header_branch
                %251 = sbr.rel (%p249) target = $region59
              $region56: #{rollout.1} parent=51 // loop_body
                %v255 = vld [vmem:[%s253] sm:%s246]
                %256 = vst [vmem:[%s254] sm:%s246] %v255
                %v257 = vld [vmem:[%s253 + $0x10] sm:%s246]
                %258 = vst [vmem:[%s254 + $0x8] sm:%s246] %v257
                %v259 = vld [vmem:[%s253 + $0x20] sm:%s246]
                %260 = vst [vmem:[%s254 + $0x10] sm:%s246] %v259
                %v261 = vld [vmem:[%s253 + $0x30] sm:%s246]
                %262 = vst [vmem:[%s254 + $0x18] sm:%s246] %v261
                %v263 = vld [vmem:[%s253 + $0x40] sm:%s246]
                %264 = vst [vmem:[%s254 + $0x20] sm:%s246] %v263
                %v265 = vld [vmem:[%s253 + $0x50] sm:%s246]
                %266 = vst [vmem:[%s254 + $0x28] sm:%s246] %v265
                %v267 = vld [vmem:[%s253 + $0x60] sm:%s246]
                %268 = vst [vmem:[%s254 + $0x30] sm:%s246] %v267
                %v269 = vld [vmem:[%s253 + $0x70] sm:%s246]
                %270 = vst [vmem:[%s254 + $0x38] sm:%s246] %v269
              $region57: #{rollout.1} parent=51 // loop_footer
                %s252 = sadd.s32 1, %s248
              $region58: #{rollout.1} parent=51 // loop_footer_branch
                %247 = sbr.rel target = $region54
              $region59: #{rollout.1} parent=51 // loop_exit
                _
            $region52: #{rollout.1} parent=43 // pred_fallthru
              _
          $region44: #{rollout.1} parent=39 // pred_fallthru
            _
          %299 = vnop
        $region40: #{rollout.1} parent=35 // pred_fallthru
          _
        // Predicated region
        $region75: #{rollout.1} parent=35 // pred_check
          %p300 = pneg %p80
        $region76: #{rollout.1} parent=35 // pred_check_branch
          %302 = sbr.rel (%p300) target = $region78
        $region77: #{rollout.1} parent=35 // pred_region
          %p303 = scmp.lt.s32.totalorder %s13, 1
          %s304 = scalar_select %p303, %s13, 1
          %s305 = smul.addr %s304, 8
          %s306 = scalar_lea.vmem %s2, %s305
        $region78: #{rollout.1} parent=35 // pred_fallthru
          _
      $region36: #{rollout.1} parent=5 // pred_fallthru
        _
      %p307 = scmp.le.s32.totalorder 1, %s13
      %p308 = scmp.lt.s32.totalorder %s13, 3
      %p309 = pnand %p307, %p308
      %p310 = pneg %p309
      // Predicated region
      $region79: #{rollout.1} parent=5 // pred_check
        _
      $region80: #{rollout.1} parent=5 // pred_check_branch
        %312 = sbr.rel (%p309) target = $region82
      $region81: #{rollout.1} parent=5 // pred_region
        %s313 = ssub.s32 %s13, 1
        %s314 = sand.u32 %s47, 1
        %s315 = sand.u32 %s47, 1
        %s316 = smul.addr %s315, 64
        %s317 = scalar_lea.vmem [#allocation2], %s316
        // Predicated region
        $region83: #{rollout.1} parent=81 // pred_check
          %p318 = pneg %p60
        $region84: #{rollout.1} parent=81 // pred_check_branch
          %320 = sbr.rel (%p318) target = $region86
        $region85: #{rollout.1} parent=81 // pred_region
          _
        $region86: #{rollout.1} parent=81 // pred_fallthru
          _
        %p321 = pneg %p34
        %p322 = pneg %p31
        %s323 = sand.u32 %s47, 1
        %s324 = sand.u32 %s47, 1
        %s325 = smul.addr %s324, 64
        %s326 = scalar_lea.vmem [#allocation2], %s325
        %p327 = pneg %p60
        %p328 = pneg %p57
        %p329 = scmp.lt.s32.totalorder %s18, 1
        %s330 = scalar_select %p329, %s18, 1
        %s331 = smul.addr %s330, 8
        %s332 = scalar_lea.vmem %s2, %s331
        %p333 = pneg %p86
        %p334 = pneg %p83
        %p335 = pneg %p107
        %p336 = pneg %p104
        %p337 = pneg %p128
        %p338 = pneg %p125
        %p339 = pneg %p149
        %p340 = pneg %p146
        %p341 = pneg %p170
        %p342 = pneg %p167
        %p343 = pneg %p196
        %p344 = pneg %p193
        %s345 = sand.u32 %s183, 1
        %s346 = sand.u32 %s183, 1
        %s347 = smul.addr %s346, 64
        %s348 = scalar_lea.vmem [#allocation3], %s347
        %p349 = scmp.lt.s32.totalorder %s18, 1
        %s350 = scalar_select %p349, %s18, 1
        %s351 = smul.addr %s350, 8
        %s352 = scalar_lea.vmem %s2, %s351
        %v353 = vld [vmem:[%s3] sm:$0xff]
        %v354 = vld [vmem:[%s3 + $0x8] sm:$0xff]
        %v355 = vld [vmem:[%s3 + $0x10] sm:$0xff]
        %v356 = vld [vmem:[%s3 + $0x18] sm:$0xff]
        %v357 = vld [vmem:[%s3 + $0x20] sm:$0xff]
        %v358 = vld [vmem:[%s3 + $0x28] sm:$0xff]
        %v359 = vld [vmem:[%s3 + $0x30] sm:$0xff]
        %v360 = vld [vmem:[%s3 + $0x38] sm:$0xff]
        %v361 = vld [vmem:[%s3 + $0x40] sm:$0xff]
        %v362 = vld [vmem:[%s3 + $0x48] sm:$0xff]
        %v363 = vld [vmem:[%s3 + $0x50] sm:$0xff]
        %v364 = vld [vmem:[%s3 + $0x58] sm:$0xff]
        %v365 = vld [vmem:[%s3 + $0x60] sm:$0xff]
        %v366 = vld [vmem:[%s3 + $0x68] sm:$0xff]
        %v367 = vld [vmem:[%s3 + $0x70] sm:$0xff]
        %v368 = vld [vmem:[%s3 + $0x78] sm:$0xff]
        %v369 = vld [vmem:[%s4] sm:$0xff]
        %v370 = vld [vmem:[%s5] sm:$0xff]
        %v371 = vld [vmem:[%s0] sm:$0xff]
        %v372 = vld [vmem:[%s6] sm:$0x1]
        %374 = vset.pattern.permute.xlu0 0
        %375 = vperm.xlu0 %374, %v371
        %v376 = vpop.permute.xlu0 %375
        %v379 = vperm.slane %v372, 0
        %v381 = vmul.f32 %v376, %v379
        %v382 = vld [vmem:[%s317] sm:$0xff]
        %v383 = vld [vmem:[%s317 + $0x8] sm:$0xff]
        %v384 = vld [vmem:[%s317 + $0x10] sm:$0xff]
        %v385 = vld [vmem:[%s317 + $0x18] sm:$0xff]
        %v386 = vld [vmem:[%s317 + $0x20] sm:$0xff]
        %v387 = vld [vmem:[%s317 + $0x28] sm:$0xff]
        %v388 = vld [vmem:[%s317 + $0x30] sm:$0xff]
        %v389 = vld [vmem:[%s317 + $0x38] sm:$0xff]
        %v390 = vperm.slane %v381, 0
        %vm391 = vcmask 64512
        %v393 = vsel %vm391, %v382, 0
        %395 = vmatpush.msra.mxu0 0.0
        %396 = vmatpush.msra.mxu0 0.0
        %397 = vmatpush.msra.mxu0 0.0
        %398 = vmatpush.msra.mxu0 0.0
        %399 = vmatpush.msra.mxu0 0.0
        %400 = vmatpush.msra.mxu0 0.0
        %401 = vmatpush.msra.mxu0 0.0
        %402 = vmatpush.msra.mxu0 0.0
        %403 = vmatpush.msra.mxu0 0.0
        %404 = vmatpush.msra.mxu0 0.0
        %405 = vmatpush.msra.mxu0 0.0
        %406 = vmatpush.msra.mxu0 0.0
        %407 = vmatpush.msra.mxu0 0.0
        %408 = vmatpush.msra.mxu0 0.0
        %409 = vmatpush.msra.mxu0 0.0
        %410 = vmatpush.msra.mxu0 %v369
        %411 = vmatmul.f32.gmra.mxu0 %v393
        %v412 = vpop.f32.mrf.mxu0
        %v413 = vadd.f32 %v390, %v412
        %414 = vdwg.mxu0
        %v415 = vperm.slane %v381, 1
        %v417 = vsel %vm391, %v383, 0
        %419 = vmatpush.msra.mxu0 0.0
        %420 = vmatpush.msra.mxu0 0.0
        %421 = vmatpush.msra.mxu0 0.0
        %422 = vmatpush.msra.mxu0 0.0
        %423 = vmatpush.msra.mxu0 0.0
        %424 = vmatpush.msra.mxu0 0.0
        %425 = vmatpush.msra.mxu0 0.0
        %426 = vmatpush.msra.mxu0 0.0
        %427 = vmatpush.msra.mxu0 0.0
        %428 = vmatpush.msra.mxu0 0.0
        %429 = vmatpush.msra.mxu0 0.0
        %430 = vmatpush.msra.mxu0 0.0
        %431 = vmatpush.msra.mxu0 0.0
        %432 = vmatpush.msra.mxu0 0.0
        %433 = vmatpush.msra.mxu0 0.0
        %434 = vmatpush.msra.mxu0 %v369
        %435 = vmatmul.f32.gmra.mxu0 %v417
        %v436 = vpop.f32.mrf.mxu0
        %v437 = vadd.f32 %v415, %v436
        %438 = vdwg.mxu0
        %v439 = vperm.slane %v381, 2
        %v441 = vsel %vm391, %v384, 0
        %443 = vmatpush.msra.mxu0 0.0
        %444 = vmatpush.msra.mxu0 0.0
        %445 = vmatpush.msra.mxu0 0.0
        %446 = vmatpush.msra.mxu0 0.0
        %447 = vmatpush.msra.mxu0 0.0
        %448 = vmatpush.msra.mxu0 0.0
        %449 = vmatpush.msra.mxu0 0.0
        %450 = vmatpush.msra.mxu0 0.0
        %451 = vmatpush.msra.mxu0 0.0
        %452 = vmatpush.msra.mxu0 0.0
        %453 = vmatpush.msra.mxu0 0.0
        %454 = vmatpush.msra.mxu0 0.0
        %455 = vmatpush.msra.mxu0 0.0
        %456 = vmatpush.msra.mxu0 0.0
        %457 = vmatpush.msra.mxu0 0.0
        %458 = vmatpush.msra.mxu0 %v369
        %459 = vmatmul.f32.gmra.mxu0 %v441
        %v460 = vpop.f32.mrf.mxu0
        %v461 = vadd.f32 %v439, %v460
        %462 = vdwg.mxu0
        %v463 = vperm.slane %v381, 3
        %v465 = vsel %vm391, %v385, 0
        %467 = vmatpush.msra.mxu0 0.0
        %468 = vmatpush.msra.mxu0 0.0
        %469 = vmatpush.msra.mxu0 0.0
        %470 = vmatpush.msra.mxu0 0.0
        %471 = vmatpush.msra.mxu0 0.0
        %472 = vmatpush.msra.mxu0 0.0
        %473 = vmatpush.msra.mxu0 0.0
        %474 = vmatpush.msra.mxu0 0.0
        %475 = vmatpush.msra.mxu0 0.0
        %476 = vmatpush.msra.mxu0 0.0
        %477 = vmatpush.msra.mxu0 0.0
        %478 = vmatpush.msra.mxu0 0.0
        %479 = vmatpush.msra.mxu0 0.0
        %480 = vmatpush.msra.mxu0 0.0
        %481 = vmatpush.msra.mxu0 0.0
        %482 = vmatpush.msra.mxu0 %v369
        %483 = vmatmul.f32.gmra.mxu0 %v465
        %v484 = vpop.f32.mrf.mxu0
        %v485 = vadd.f32 %v463, %v484
        %486 = vdwg.mxu0
        %v487 = vperm.slane %v381, 4
        %v489 = vsel %vm391, %v386, 0
        %491 = vmatpush.msra.mxu0 0.0
        %492 = vmatpush.msra.mxu0 0.0
        %493 = vmatpush.msra.mxu0 0.0
        %494 = vmatpush.msra.mxu0 0.0
        %495 = vmatpush.msra.mxu0 0.0
        %496 = vmatpush.msra.mxu0 0.0
        %497 = vmatpush.msra.mxu0 0.0
        %498 = vmatpush.msra.mxu0 0.0
        %499 = vmatpush.msra.mxu0 0.0
        %500 = vmatpush.msra.mxu0 0.0
        %501 = vmatpush.msra.mxu0 0.0
        %502 = vmatpush.msra.mxu0 0.0
        %503 = vmatpush.msra.mxu0 0.0
        %504 = vmatpush.msra.mxu0 0.0
        %505 = vmatpush.msra.mxu0 0.0
        %506 = vmatpush.msra.mxu0 %v369
        %507 = vmatmul.f32.gmra.mxu0 %v489
        %v508 = vpop.f32.mrf.mxu0
        %v509 = vadd.f32 %v487, %v508
        %510 = vdwg.mxu0
        %v511 = vperm.slane %v381, 5
        %v513 = vsel %vm391, %v387, 0
        %515 = vmatpush.msra.mxu0 0.0
        %516 = vmatpush.msra.mxu0 0.0
        %517 = vmatpush.msra.mxu0 0.0
        %518 = vmatpush.msra.mxu0 0.0
        %519 = vmatpush.msra.mxu0 0.0
        %520 = vmatpush.msra.mxu0 0.0
        %521 = vmatpush.msra.mxu0 0.0
        %522 = vmatpush.msra.mxu0 0.0
        %523 = vmatpush.msra.mxu0 0.0
        %524 = vmatpush.msra.mxu0 0.0
        %525 = vmatpush.msra.mxu0 0.0
        %526 = vmatpush.msra.mxu0 0.0
        %527 = vmatpush.msra.mxu0 0.0
        %528 = vmatpush.msra.mxu0 0.0
        %529 = vmatpush.msra.mxu0 0.0
        %530 = vmatpush.msra.mxu0 %v369
        %531 = vmatmul.f32.gmra.mxu0 %v513
        %v532 = vpop.f32.mrf.mxu0
        %v533 = vadd.f32 %v511, %v532
        %534 = vdwg.mxu0
        %v535 = vperm.slane %v381, 6
        %v537 = vsel %vm391, %v388, 0
        %539 = vmatpush.msra.mxu0 0.0
        %540 = vmatpush.msra.mxu0 0.0
        %541 = vmatpush.msra.mxu0 0.0
        %542 = vmatpush.msra.mxu0 0.0
        %543 = vmatpush.msra.mxu0 0.0
        %544 = vmatpush.msra.mxu0 0.0
        %545 = vmatpush.msra.mxu0 0.0
        %546 = vmatpush.msra.mxu0 0.0
        %547 = vmatpush.msra.mxu0 0.0
        %548 = vmatpush.msra.mxu0 0.0
        %549 = vmatpush.msra.mxu0 0.0
        %550 = vmatpush.msra.mxu0 0.0
        %551 = vmatpush.msra.mxu0 0.0
        %552 = vmatpush.msra.mxu0 0.0
        %553 = vmatpush.msra.mxu0 0.0
        %554 = vmatpush.msra.mxu0 %v369
        %555 = vmatmul.f32.gmra.mxu0 %v537
        %v556 = vpop.f32.mrf.mxu0
        %v557 = vadd.f32 %v535, %v556
        %558 = vdwg.mxu0
        %v559 = vperm.slane %v381, 7
        %v561 = vsel %vm391, %v389, 0
        %563 = vmatpush.msra.mxu0 0.0
        %564 = vmatpush.msra.mxu0 0.0
        %565 = vmatpush.msra.mxu0 0.0
        %566 = vmatpush.msra.mxu0 0.0
        %567 = vmatpush.msra.mxu0 0.0
        %568 = vmatpush.msra.mxu0 0.0
        %569 = vmatpush.msra.mxu0 0.0
        %570 = vmatpush.msra.mxu0 0.0
        %571 = vmatpush.msra.mxu0 0.0
        %572 = vmatpush.msra.mxu0 0.0
        %573 = vmatpush.msra.mxu0 0.0
        %574 = vmatpush.msra.mxu0 0.0
        %575 = vmatpush.msra.mxu0 0.0
        %576 = vmatpush.msra.mxu0 0.0
        %577 = vmatpush.msra.mxu0 0.0
        %578 = vmatpush.msra.mxu0 %v369
        %579 = vmatmul.f32.gmra.mxu0 %v561
        %v580 = vpop.f32.mrf.mxu0
        %v581 = vadd.f32 %v559, %v580
        %582 = vdwg.mxu0
        %v583 = vlaneseq
        %v584 = vand.u32 %v583, 127
        %vm585 = vcmp.ge.s32.totalorder %v584, 8
        %vm586 = vcmp.lt.s32.totalorder %v584, 11
        %vm587 = vmand %vm585, %vm586
        %v588 = vld [vmem:[%s352] sm:$0xff]
        %589 = vmatpush.msra.mxu0 %v368
        %590 = vmatpush.msra.mxu0 %v367
        %591 = vmatpush.msra.mxu0 %v366
        %592 = vmatpush.msra.mxu0 %v365
        %593 = vmatpush.msra.mxu0 %v364
        %594 = vmatpush.msra.mxu0 %v363
        %595 = vmatpush.msra.mxu0 %v362
        %596 = vmatpush.msra.mxu0 %v361
        %597 = vmatpush.msra.mxu0 %v360
        %598 = vmatpush.msra.mxu0 %v359
        %599 = vmatpush.msra.mxu0 %v358
        %600 = vmatpush.msra.mxu0 %v357
        %601 = vmatpush.msra.mxu0 %v356
        %602 = vmatpush.msra.mxu0 %v355
        %603 = vmatpush.msra.mxu0 %v354
        %604 = vmatpush.msra.mxu0 %v353
        %605 = vmatmul.f32.gmra.mxu0 %v588
        %v606 = vpop.f32.mrf.mxu0
        %v607 = vadd.f32 %v413, %v606
        %608 = vdwg.mxu0
        %v609 = vtanh.pop %v607
        %611 = vset.pattern.permute.xlu0 0
        %612 = vperm.xlu0 %611, %v609
        %v613 = vpop.permute.xlu0 %612
        %v615 = vperm.slane %v370, 0
        %v616 = vmul.f32 %v613, %v615
        %v617 = vadd.f32 %v607, %v616
        %v618 = vtanh.pop %v617
        %620 = vset.pattern.permute.xlu0 1
        %621 = vperm.xlu0 %620, %v618
        %v622 = vpop.permute.xlu0 %621
        %v624 = vperm.slane %v370, 1
        %v625 = vmul.f32 %v622, %v624
        %v626 = vadd.f32 %v617, %v625
        %v627 = vtanh.pop %v626
        %629 = vset.pattern.permute.xlu0 2
        %630 = vperm.xlu0 %629, %v627
        %v631 = vpop.permute.xlu0 %630
        %v633 = vperm.slane %v370, 2
        %v634 = vmul.f32 %v631, %v633
        %v635 = vadd.f32 %v626, %v634
        %v636 = vtanh.pop %v635
        %638 = vset.pattern.permute.xlu0 3
        %639 = vperm.xlu0 %638, %v636
        %v640 = vpop.permute.xlu0 %639
        %v642 = vperm.slane %v370, 3
        %v643 = vmul.f32 %v640, %v642
        %v644 = vadd.f32 %v635, %v643
        %v645 = vtanh.pop %v644
        %647 = vset.pattern.permute.xlu0 4
        %648 = vperm.xlu0 %647, %v645
        %v649 = vpop.permute.xlu0 %648
        %v651 = vperm.slane %v370, 4
        %v652 = vmul.f32 %v649, %v651
        %v653 = vadd.f32 %v644, %v652
        %v654 = vtanh.pop %v653
        %656 = vset.pattern.permute.xlu0 5
        %657 = vperm.xlu0 %656, %v654
        %v658 = vpop.permute.xlu0 %657
        %v660 = vperm.slane %v370, 5
        %v661 = vmul.f32 %v658, %v660
        %v662 = vadd.f32 %v653, %v661
        %v663 = vtanh.pop %v662
        %665 = vset.pattern.permute.xlu0 6
        %666 = vperm.xlu0 %665, %v663
        %v667 = vpop.permute.xlu0 %666
        %v669 = vperm.slane %v370, 6
        %v670 = vmul.f32 %v667, %v669
        %v671 = vadd.f32 %v662, %v670
        %v672 = vtanh.pop %v671
        %674 = vset.pattern.permute.xlu0 7
        %675 = vperm.xlu0 %674, %v672
        %v676 = vpop.permute.xlu0 %675
        %v678 = vperm.slane %v370, 7
        %v679 = vmul.f32 %v676, %v678
        %v680 = vadd.f32 %v671, %v679
        %v681 = vxor.u32 %v680, 2147483648
        %v682 = vmul.f32 %v681, 1.442695
        %v683 = vpow.pop %v682
        %v684 = vadd.f32 %v683, 1.0
        %v685 = vrcp.pop %v684
        %v686 = vmul.f32 %v684, %v685
        %v687 = vsub.f32 1.0, %v686
        %v688 = vmul.f32 %v685, %v687
        %v689 = vadd.f32 %v685, %v688
        %vm690 = vweird.f32 %v684
        %vm691 = vweird.f32 %v685
        %vm692 = vmor %vm690, %vm691
        %v693 = vsel %vm692, %v685, %v689
        %v694 = vand.u32 2147483647, %v684
        %vm695 = vcmp.eq.f32.partialorder %v694, 8.507059e+37
        %v696 = vand.u32 %v684, 2147483648
        %v697 = vor.u32 1.1754944e-38, %v696
        %v698 = vsel %vm695, %v697, %v693
        %v699 = vmul.f32 1.0, %v698
        %v700 = vmul.f32 %v699, 4.8
        %v701 = vadd.f32 %v700, 8.0
        %v702 = vsel %vm587, 1, 0
        %vm703 = vcmp.eq.s32.totalorder %v702, 1
        %v704 = vsel %vm703, %v701, %v680
        %705 = vst [vmem:[%s348] sm:$0xff] %v704
        %706 = vmatpush.msra.mxu0 %v368
        %707 = vmatpush.msra.mxu0 %v367
        %708 = vmatpush.msra.mxu0 %v366
        %709 = vmatpush.msra.mxu0 %v365
        %710 = vmatpush.msra.mxu0 %v364
        %711 = vmatpush.msra.mxu0 %v363
        %712 = vmatpush.msra.mxu0 %v362
        %713 = vmatpush.msra.mxu0 %v361
        %714 = vmatpush.msra.mxu0 %v360
        %715 = vmatpush.msra.mxu0 %v359
        %716 = vmatpush.msra.mxu0 %v358
        %717 = vmatpush.msra.mxu0 %v357
        %718 = vmatpush.msra.mxu0 %v356
        %719 = vmatpush.msra.mxu0 %v355
        %720 = vmatpush.msra.mxu0 %v354
        %721 = vmatpush.msra.mxu0 %v353
        %722 = vmatmul.f32.gmra.mxu0 %v680
        %v723 = vpop.f32.mrf.mxu0
        %v724 = vadd.f32 %v437, %v723
        %725 = vdwg.mxu0
        %v726 = vtanh.pop %v724
        %728 = vset.pattern.permute.xlu0 0
        %729 = vperm.xlu0 %728, %v726
        %v730 = vpop.permute.xlu0 %729
        %v732 = vmul.f32 %v730, %v615
        %v733 = vadd.f32 %v724, %v732
        %v734 = vtanh.pop %v733
        %736 = vset.pattern.permute.xlu0 1
        %737 = vperm.xlu0 %736, %v734
        %v738 = vpop.permute.xlu0 %737
        %v740 = vmul.f32 %v738, %v624
        %v741 = vadd.f32 %v733, %v740
        %v742 = vtanh.pop %v741
        %744 = vset.pattern.permute.xlu0 2
        %745 = vperm.xlu0 %744, %v742
        %v746 = vpop.permute.xlu0 %745
        %v748 = vmul.f32 %v746, %v633
        %v749 = vadd.f32 %v741, %v748
        %v750 = vtanh.pop %v749
        %752 = vset.pattern.permute.xlu0 3
        %753 = vperm.xlu0 %752, %v750
        %v754 = vpop.permute.xlu0 %753
        %v756 = vmul.f32 %v754, %v642
        %v757 = vadd.f32 %v749, %v756
        %v758 = vtanh.pop %v757
        %760 = vset.pattern.permute.xlu0 4
        %761 = vperm.xlu0 %760, %v758
        %v762 = vpop.permute.xlu0 %761
        %v764 = vmul.f32 %v762, %v651
        %v765 = vadd.f32 %v757, %v764
        %v766 = vtanh.pop %v765
        %768 = vset.pattern.permute.xlu0 5
        %769 = vperm.xlu0 %768, %v766
        %v770 = vpop.permute.xlu0 %769
        %v772 = vmul.f32 %v770, %v660
        %v773 = vadd.f32 %v765, %v772
        %v774 = vtanh.pop %v773
        %776 = vset.pattern.permute.xlu0 6
        %777 = vperm.xlu0 %776, %v774
        %v778 = vpop.permute.xlu0 %777
        %v780 = vmul.f32 %v778, %v669
        %v781 = vadd.f32 %v773, %v780
        %v782 = vtanh.pop %v781
        %784 = vset.pattern.permute.xlu0 7
        %785 = vperm.xlu0 %784, %v782
        %v786 = vpop.permute.xlu0 %785
        %v788 = vmul.f32 %v786, %v678
        %v789 = vadd.f32 %v781, %v788
        %v790 = vxor.u32 %v789, 2147483648
        %v791 = vmul.f32 %v790, 1.442695
        %v792 = vpow.pop %v791
        %v793 = vadd.f32 %v792, 1.0
        %v794 = vrcp.pop %v793
        %v795 = vmul.f32 %v793, %v794
        %v796 = vsub.f32 1.0, %v795
        %v797 = vmul.f32 %v794, %v796
        %v798 = vadd.f32 %v794, %v797
        %vm799 = vweird.f32 %v793
        %vm800 = vweird.f32 %v794
        %vm801 = vmor %vm799, %vm800
        %v802 = vsel %vm801, %v794, %v798
        %v803 = vand.u32 2147483647, %v793
        %vm804 = vcmp.eq.f32.partialorder %v803, 8.507059e+37
        %v805 = vand.u32 %v793, 2147483648
        %v806 = vor.u32 1.1754944e-38, %v805
        %v807 = vsel %vm804, %v806, %v802
        %v808 = vmul.f32 1.0, %v807
        %v809 = vmul.f32 %v808, 4.8
        %v810 = vadd.f32 %v809, 8.0
        %v811 = vsel %vm703, %v810, %v789
        %s812 = scalar_lea.vmem %s348, 8 [#allocation3]
        %813 = vst [vmem:[%s812] sm:$0xff] %v811
        %814 = vmatpush.msra.mxu0 %v368
        %815 = vmatpush.msra.mxu0 %v367
        %816 = vmatpush.msra.mxu0 %v366
        %817 = vmatpush.msra.mxu0 %v365
        %818 = vmatpush.msra.mxu0 %v364
        %819 = vmatpush.msra.mxu0 %v363
        %820 = vmatpush.msra.mxu0 %v362
        %821 = vmatpush.msra.mxu0 %v361
        %822 = vmatpush.msra.mxu0 %v360
        %823 = vmatpush.msra.mxu0 %v359
        %824 = vmatpush.msra.mxu0 %v358
        %825 = vmatpush.msra.mxu0 %v357
        %826 = vmatpush.msra.mxu0 %v356
        %827 = vmatpush.msra.mxu0 %v355
        %828 = vmatpush.msra.mxu0 %v354
        %829 = vmatpush.msra.mxu0 %v353
        %830 = vmatmul.f32.gmra.mxu0 %v789
        %v831 = vpop.f32.mrf.mxu0
        %v832 = vadd.f32 %v461, %v831
        %833 = vdwg.mxu0
        %v834 = vtanh.pop %v832
        %836 = vset.pattern.permute.xlu0 0
        %837 = vperm.xlu0 %836, %v834
        %v838 = vpop.permute.xlu0 %837
        %v840 = vmul.f32 %v838, %v615
        %v841 = vadd.f32 %v832, %v840
        %v842 = vtanh.pop %v841
        %844 = vset.pattern.permute.xlu0 1
        %845 = vperm.xlu0 %844, %v842
        %v846 = vpop.permute.xlu0 %845
        %v848 = vmul.f32 %v846, %v624
        %v849 = vadd.f32 %v841, %v848
        %v850 = vtanh.pop %v849
        %852 = vset.pattern.permute.xlu0 2
        %853 = vperm.xlu0 %852, %v850
        %v854 = vpop.permute.xlu0 %853
        %v856 = vmul.f32 %v854, %v633
        %v857 = vadd.f32 %v849, %v856
        %v858 = vtanh.pop %v857
        %860 = vset.pattern.permute.xlu0 3
        %861 = vperm.xlu0 %860, %v858
        %v862 = vpop.permute.xlu0 %861
        %v864 = vmul.f32 %v862, %v642
        %v865 = vadd.f32 %v857, %v864
        %v866 = vtanh.pop %v865
        %868 = vset.pattern.permute.xlu0 4
        %869 = vperm.xlu0 %868, %v866
        %v870 = vpop.permute.xlu0 %869
        %v872 = vmul.f32 %v870, %v651
        %v873 = vadd.f32 %v865, %v872
        %v874 = vtanh.pop %v873
        %876 = vset.pattern.permute.xlu0 5
        %877 = vperm.xlu0 %876, %v874
        %v878 = vpop.permute.xlu0 %877
        %v880 = vmul.f32 %v878, %v660
        %v881 = vadd.f32 %v873, %v880
        %v882 = vtanh.pop %v881
        %884 = vset.pattern.permute.xlu0 6
        %885 = vperm.xlu0 %884, %v882
        %v886 = vpop.permute.xlu0 %885
        %v888 = vmul.f32 %v886, %v669
        %v889 = vadd.f32 %v881, %v888
        %v890 = vtanh.pop %v889
        %892 = vset.pattern.permute.xlu0 7
        %893 = vperm.xlu0 %892, %v890
        %v894 = vpop.permute.xlu0 %893
        %v896 = vmul.f32 %v894, %v678
        %v897 = vadd.f32 %v889, %v896
        %v898 = vxor.u32 %v897, 2147483648
        %v899 = vmul.f32 %v898, 1.442695
        %v900 = vpow.pop %v899
        %v901 = vadd.f32 %v900, 1.0
        %v902 = vrcp.pop %v901
        %v903 = vmul.f32 %v901, %v902
        %v904 = vsub.f32 1.0, %v903
        %v905 = vmul.f32 %v902, %v904
        %v906 = vadd.f32 %v902, %v905
        %vm907 = vweird.f32 %v901
        %vm908 = vweird.f32 %v902
        %vm909 = vmor %vm907, %vm908
        %v910 = vsel %vm909, %v902, %v906
        %v911 = vand.u32 2147483647, %v901
        %vm912 = vcmp.eq.f32.partialorder %v911, 8.507059e+37
        %v913 = vand.u32 %v901, 2147483648
        %v914 = vor.u32 1.1754944e-38, %v913
        %v915 = vsel %vm912, %v914, %v910
        %v916 = vmul.f32 1.0, %v915
        %v917 = vmul.f32 %v916, 4.8
        %v918 = vadd.f32 %v917, 8.0
        %v919 = vsel %vm703, %v918, %v897
        %s920 = scalar_lea.vmem %s348, 16 [#allocation3]
        %921 = vst [vmem:[%s920] sm:$0xff] %v919
        %922 = vmatpush.msra.mxu0 %v368
        %923 = vmatpush.msra.mxu0 %v367
        %924 = vmatpush.msra.mxu0 %v366
        %925 = vmatpush.msra.mxu0 %v365
        %926 = vmatpush.msra.mxu0 %v364
        %927 = vmatpush.msra.mxu0 %v363
        %928 = vmatpush.msra.mxu0 %v362
        %929 = vmatpush.msra.mxu0 %v361
        %930 = vmatpush.msra.mxu0 %v360
        %931 = vmatpush.msra.mxu0 %v359
        %932 = vmatpush.msra.mxu0 %v358
        %933 = vmatpush.msra.mxu0 %v357
        %934 = vmatpush.msra.mxu0 %v356
        %935 = vmatpush.msra.mxu0 %v355
        %936 = vmatpush.msra.mxu0 %v354
        %937 = vmatpush.msra.mxu0 %v353
        %938 = vmatmul.f32.gmra.mxu0 %v897
        %v939 = vpop.f32.mrf.mxu0
        %v940 = vadd.f32 %v485, %v939
        %941 = vdwg.mxu0
        %v942 = vtanh.pop %v940
        %944 = vset.pattern.permute.xlu0 0
        %945 = vperm.xlu0 %944, %v942
        %v946 = vpop.permute.xlu0 %945
        %v948 = vmul.f32 %v946, %v615
        %v949 = vadd.f32 %v940, %v948
        %v950 = vtanh.pop %v949
        %952 = vset.pattern.permute.xlu0 1
        %953 = vperm.xlu0 %952, %v950
        %v954 = vpop.permute.xlu0 %953
        %v956 = vmul.f32 %v954, %v624
        %v957 = vadd.f32 %v949, %v956
        %v958 = vtanh.pop %v957
        %960 = vset.pattern.permute.xlu0 2
        %961 = vperm.xlu0 %960, %v958
        %v962 = vpop.permute.xlu0 %961
        %v964 = vmul.f32 %v962, %v633
        %v965 = vadd.f32 %v957, %v964
        %v966 = vtanh.pop %v965
        %968 = vset.pattern.permute.xlu0 3
        %969 = vperm.xlu0 %968, %v966
        %v970 = vpop.permute.xlu0 %969
        %v972 = vmul.f32 %v970, %v642
        %v973 = vadd.f32 %v965, %v972
        %v974 = vtanh.pop %v973
        %976 = vset.pattern.permute.xlu0 4
        %977 = vperm.xlu0 %976, %v974
        %v978 = vpop.permute.xlu0 %977
        %v980 = vmul.f32 %v978, %v651
        %v981 = vadd.f32 %v973, %v980
        %v982 = vtanh.pop %v981
        %984 = vset.pattern.permute.xlu0 5
        %985 = vperm.xlu0 %984, %v982
        %v986 = vpop.permute.xlu0 %985
        %v988 = vmul.f32 %v986, %v660
        %v989 = vadd.f32 %v981, %v988
        %v990 = vtanh.pop %v989
        %992 = vset.pattern.permute.xlu0 6
        %993 = vperm.xlu0 %992, %v990
        %v994 = vpop.permute.xlu0 %993
        %v996 = vmul.f32 %v994, %v669
        %v997 = vadd.f32 %v989, %v996
        %v998 = vtanh.pop %v997
        %1000 = vset.pattern.permute.xlu0 7
        %1001 = vperm.xlu0 %1000, %v998
        %v1002 = vpop.permute.xlu0 %1001
        %v1004 = vmul.f32 %v1002, %v678
        %v1005 = vadd.f32 %v997, %v1004
        %v1006 = vxor.u32 %v1005, 2147483648
        %v1007 = vmul.f32 %v1006, 1.442695
        %v1008 = vpow.pop %v1007
        %v1009 = vadd.f32 %v1008, 1.0
        %v1010 = vrcp.pop %v1009
        %v1011 = vmul.f32 %v1009, %v1010
        %v1012 = vsub.f32 1.0, %v1011
        %v1013 = vmul.f32 %v1010, %v1012
        %v1014 = vadd.f32 %v1010, %v1013
        %vm1015 = vweird.f32 %v1009
        %vm1016 = vweird.f32 %v1010
        %vm1017 = vmor %vm1015, %vm1016
        %v1018 = vsel %vm1017, %v1010, %v1014
        %v1019 = vand.u32 2147483647, %v1009
        %vm1020 = vcmp.eq.f32.partialorder %v1019, 8.507059e+37
        %v1021 = vand.u32 %v1009, 2147483648
        %v1022 = vor.u32 1.1754944e-38, %v1021
        %v1023 = vsel %vm1020, %v1022, %v1018
        %v1024 = vmul.f32 1.0, %v1023
        %v1025 = vmul.f32 %v1024, 4.8
        %v1026 = vadd.f32 %v1025, 8.0
        %v1027 = vsel %vm703, %v1026, %v1005
        %s1028 = scalar_lea.vmem %s348, 24 [#allocation3]
        %1029 = vst [vmem:[%s1028] sm:$0xff] %v1027
        %1030 = vmatpush.msra.mxu0 %v368
        %1031 = vmatpush.msra.mxu0 %v367
        %1032 = vmatpush.msra.mxu0 %v366
        %1033 = vmatpush.msra.mxu0 %v365
        %1034 = vmatpush.msra.mxu0 %v364
        %1035 = vmatpush.msra.mxu0 %v363
        %1036 = vmatpush.msra.mxu0 %v362
        %1037 = vmatpush.msra.mxu0 %v361
        %1038 = vmatpush.msra.mxu0 %v360
        %1039 = vmatpush.msra.mxu0 %v359
        %1040 = vmatpush.msra.mxu0 %v358
        %1041 = vmatpush.msra.mxu0 %v357
        %1042 = vmatpush.msra.mxu0 %v356
        %1043 = vmatpush.msra.mxu0 %v355
        %1044 = vmatpush.msra.mxu0 %v354
        %1045 = vmatpush.msra.mxu0 %v353
        %1046 = vmatmul.f32.gmra.mxu0 %v1005
        %v1047 = vpop.f32.mrf.mxu0
        %v1048 = vadd.f32 %v509, %v1047
        %1049 = vdwg.mxu0
        %v1050 = vtanh.pop %v1048
        %1052 = vset.pattern.permute.xlu0 0
        %1053 = vperm.xlu0 %1052, %v1050
        %v1054 = vpop.permute.xlu0 %1053
        %v1056 = vmul.f32 %v1054, %v615
        %v1057 = vadd.f32 %v1048, %v1056
        %v1058 = vtanh.pop %v1057
        %1060 = vset.pattern.permute.xlu0 1
        %1061 = vperm.xlu0 %1060, %v1058
        %v1062 = vpop.permute.xlu0 %1061
        %v1064 = vmul.f32 %v1062, %v624
        %v1065 = vadd.f32 %v1057, %v1064
        %v1066 = vtanh.pop %v1065
        %1068 = vset.pattern.permute.xlu0 2
        %1069 = vperm.xlu0 %1068, %v1066
        %v1070 = vpop.permute.xlu0 %1069
        %v1072 = vmul.f32 %v1070, %v633
        %v1073 = vadd.f32 %v1065, %v1072
        %v1074 = vtanh.pop %v1073
        %1076 = vset.pattern.permute.xlu0 3
        %1077 = vperm.xlu0 %1076, %v1074
        %v1078 = vpop.permute.xlu0 %1077
        %v1080 = vmul.f32 %v1078, %v642
        %v1081 = vadd.f32 %v1073, %v1080
        %v1082 = vtanh.pop %v1081
        %1084 = vset.pattern.permute.xlu0 4
        %1085 = vperm.xlu0 %1084, %v1082
        %v1086 = vpop.permute.xlu0 %1085
        %v1088 = vmul.f32 %v1086, %v651
        %v1089 = vadd.f32 %v1081, %v1088
        %v1090 = vtanh.pop %v1089
        %1092 = vset.pattern.permute.xlu0 5
        %1093 = vperm.xlu0 %1092, %v1090
        %v1094 = vpop.permute.xlu0 %1093
        %v1096 = vmul.f32 %v1094, %v660
        %v1097 = vadd.f32 %v1089, %v1096
        %v1098 = vtanh.pop %v1097
        %1100 = vset.pattern.permute.xlu0 6
        %1101 = vperm.xlu0 %1100, %v1098
        %v1102 = vpop.permute.xlu0 %1101
        %v1104 = vmul.f32 %v1102, %v669
        %v1105 = vadd.f32 %v1097, %v1104
        %v1106 = vtanh.pop %v1105
        %1108 = vset.pattern.permute.xlu0 7
        %1109 = vperm.xlu0 %1108, %v1106
        %v1110 = vpop.permute.xlu0 %1109
        %v1112 = vmul.f32 %v1110, %v678
        %v1113 = vadd.f32 %v1105, %v1112
        %v1114 = vxor.u32 %v1113, 2147483648
        %v1115 = vmul.f32 %v1114, 1.442695
        %v1116 = vpow.pop %v1115
        %v1117 = vadd.f32 %v1116, 1.0
        %v1118 = vrcp.pop %v1117
        %v1119 = vmul.f32 %v1117, %v1118
        %v1120 = vsub.f32 1.0, %v1119
        %v1121 = vmul.f32 %v1118, %v1120
        %v1122 = vadd.f32 %v1118, %v1121
        %vm1123 = vweird.f32 %v1117
        %vm1124 = vweird.f32 %v1118
        %vm1125 = vmor %vm1123, %vm1124
        %v1126 = vsel %vm1125, %v1118, %v1122
        %v1127 = vand.u32 2147483647, %v1117
        %vm1128 = vcmp.eq.f32.partialorder %v1127, 8.507059e+37
        %v1129 = vand.u32 %v1117, 2147483648
        %v1130 = vor.u32 1.1754944e-38, %v1129
        %v1131 = vsel %vm1128, %v1130, %v1126
        %v1132 = vmul.f32 1.0, %v1131
        %v1133 = vmul.f32 %v1132, 4.8
        %v1134 = vadd.f32 %v1133, 8.0
        %v1135 = vsel %vm703, %v1134, %v1113
        %s1136 = scalar_lea.vmem %s348, 32 [#allocation3]
        %1137 = vst [vmem:[%s1136] sm:$0xff] %v1135
        %1138 = vmatpush.msra.mxu0 %v368
        %1139 = vmatpush.msra.mxu0 %v367
        %1140 = vmatpush.msra.mxu0 %v366
        %1141 = vmatpush.msra.mxu0 %v365
        %1142 = vmatpush.msra.mxu0 %v364
        %1143 = vmatpush.msra.mxu0 %v363
        %1144 = vmatpush.msra.mxu0 %v362
        %1145 = vmatpush.msra.mxu0 %v361
        %1146 = vmatpush.msra.mxu0 %v360
        %1147 = vmatpush.msra.mxu0 %v359
        %1148 = vmatpush.msra.mxu0 %v358
        %1149 = vmatpush.msra.mxu0 %v357
        %1150 = vmatpush.msra.mxu0 %v356
        %1151 = vmatpush.msra.mxu0 %v355
        %1152 = vmatpush.msra.mxu0 %v354
        %1153 = vmatpush.msra.mxu0 %v353
        %1154 = vmatmul.f32.gmra.mxu0 %v1113
        %v1155 = vpop.f32.mrf.mxu0
        %v1156 = vadd.f32 %v533, %v1155
        %1157 = vdwg.mxu0
        %v1158 = vtanh.pop %v1156
        %1160 = vset.pattern.permute.xlu0 0
        %1161 = vperm.xlu0 %1160, %v1158
        %v1162 = vpop.permute.xlu0 %1161
        %v1164 = vmul.f32 %v1162, %v615
        %v1165 = vadd.f32 %v1156, %v1164
        %v1166 = vtanh.pop %v1165
        %1168 = vset.pattern.permute.xlu0 1
        %1169 = vperm.xlu0 %1168, %v1166
        %v1170 = vpop.permute.xlu0 %1169
        %v1172 = vmul.f32 %v1170, %v624
        %v1173 = vadd.f32 %v1165, %v1172
        %v1174 = vtanh.pop %v1173
        %1176 = vset.pattern.permute.xlu0 2
        %1177 = vperm.xlu0 %1176, %v1174
        %v1178 = vpop.permute.xlu0 %1177
        %v1180 = vmul.f32 %v1178, %v633
        %v1181 = vadd.f32 %v1173, %v1180
        %v1182 = vtanh.pop %v1181
        %1184 = vset.pattern.permute.xlu0 3
        %1185 = vperm.xlu0 %1184, %v1182
        %v1186 = vpop.permute.xlu0 %1185
        %v1188 = vmul.f32 %v1186, %v642
        %v1189 = vadd.f32 %v1181, %v1188
        %v1190 = vtanh.pop %v1189
        %1192 = vset.pattern.permute.xlu0 4
        %1193 = vperm.xlu0 %1192, %v1190
        %v1194 = vpop.permute.xlu0 %1193
        %v1196 = vmul.f32 %v1194, %v651
        %v1197 = vadd.f32 %v1189, %v1196
        %v1198 = vtanh.pop %v1197
        %1200 = vset.pattern.permute.xlu0 5
        %1201 = vperm.xlu0 %1200, %v1198
        %v1202 = vpop.permute.xlu0 %1201
        %v1204 = vmul.f32 %v1202, %v660
        %v1205 = vadd.f32 %v1197, %v1204
        %v1206 = vtanh.pop %v1205
        %1208 = vset.pattern.permute.xlu0 6
        %1209 = vperm.xlu0 %1208, %v1206
        %v1210 = vpop.permute.xlu0 %1209
        %v1212 = vmul.f32 %v1210, %v669
        %v1213 = vadd.f32 %v1205, %v1212
        %v1214 = vtanh.pop %v1213
        %1216 = vset.pattern.permute.xlu0 7
        %1217 = vperm.xlu0 %1216, %v1214
        %v1218 = vpop.permute.xlu0 %1217
        %v1220 = vmul.f32 %v1218, %v678
        %v1221 = vadd.f32 %v1213, %v1220
        %v1222 = vxor.u32 %v1221, 2147483648
        %v1223 = vmul.f32 %v1222, 1.442695
        %v1224 = vpow.pop %v1223
        %v1225 = vadd.f32 %v1224, 1.0
        %v1226 = vrcp.pop %v1225
        %v1227 = vmul.f32 %v1225, %v1226
        %v1228 = vsub.f32 1.0, %v1227
        %v1229 = vmul.f32 %v1226, %v1228
        %v1230 = vadd.f32 %v1226, %v1229
        %vm1231 = vweird.f32 %v1225
        %vm1232 = vweird.f32 %v1226
        %vm1233 = vmor %vm1231, %vm1232
        %v1234 = vsel %vm1233, %v1226, %v1230
        %v1235 = vand.u32 2147483647, %v1225
        %vm1236 = vcmp.eq.f32.partialorder %v1235, 8.507059e+37
        %v1237 = vand.u32 %v1225, 2147483648
        %v1238 = vor.u32 1.1754944e-38, %v1237
        %v1239 = vsel %vm1236, %v1238, %v1234
        %v1240 = vmul.f32 1.0, %v1239
        %v1241 = vmul.f32 %v1240, 4.8
        %v1242 = vadd.f32 %v1241, 8.0
        %v1243 = vsel %vm703, %v1242, %v1221
        %s1244 = scalar_lea.vmem %s348, 40 [#allocation3]
        %1245 = vst [vmem:[%s1244] sm:$0xff] %v1243
        %1246 = vmatpush.msra.mxu0 %v368
        %1247 = vmatpush.msra.mxu0 %v367
        %1248 = vmatpush.msra.mxu0 %v366
        %1249 = vmatpush.msra.mxu0 %v365
        %1250 = vmatpush.msra.mxu0 %v364
        %1251 = vmatpush.msra.mxu0 %v363
        %1252 = vmatpush.msra.mxu0 %v362
        %1253 = vmatpush.msra.mxu0 %v361
        %1254 = vmatpush.msra.mxu0 %v360
        %1255 = vmatpush.msra.mxu0 %v359
        %1256 = vmatpush.msra.mxu0 %v358
        %1257 = vmatpush.msra.mxu0 %v357
        %1258 = vmatpush.msra.mxu0 %v356
        %1259 = vmatpush.msra.mxu0 %v355
        %1260 = vmatpush.msra.mxu0 %v354
        %1261 = vmatpush.msra.mxu0 %v353
        %1262 = vmatmul.f32.gmra.mxu0 %v1221
        %v1263 = vpop.f32.mrf.mxu0
        %v1264 = vadd.f32 %v557, %v1263
        %1265 = vdwg.mxu0
        %v1266 = vtanh.pop %v1264
        %1268 = vset.pattern.permute.xlu0 0
        %1269 = vperm.xlu0 %1268, %v1266
        %v1270 = vpop.permute.xlu0 %1269
        %v1272 = vmul.f32 %v1270, %v615
        %v1273 = vadd.f32 %v1264, %v1272
        %v1274 = vtanh.pop %v1273
        %1276 = vset.pattern.permute.xlu0 1
        %1277 = vperm.xlu0 %1276, %v1274
        %v1278 = vpop.permute.xlu0 %1277
        %v1280 = vmul.f32 %v1278, %v624
        %v1281 = vadd.f32 %v1273, %v1280
        %v1282 = vtanh.pop %v1281
        %1284 = vset.pattern.permute.xlu0 2
        %1285 = vperm.xlu0 %1284, %v1282
        %v1286 = vpop.permute.xlu0 %1285
        %v1288 = vmul.f32 %v1286, %v633
        %v1289 = vadd.f32 %v1281, %v1288
        %v1290 = vtanh.pop %v1289
        %1292 = vset.pattern.permute.xlu0 3
        %1293 = vperm.xlu0 %1292, %v1290
        %v1294 = vpop.permute.xlu0 %1293
        %v1296 = vmul.f32 %v1294, %v642
        %v1297 = vadd.f32 %v1289, %v1296
        %v1298 = vtanh.pop %v1297
        %1300 = vset.pattern.permute.xlu0 4
        %1301 = vperm.xlu0 %1300, %v1298
        %v1302 = vpop.permute.xlu0 %1301
        %v1304 = vmul.f32 %v1302, %v651
        %v1305 = vadd.f32 %v1297, %v1304
        %v1306 = vtanh.pop %v1305
        %1308 = vset.pattern.permute.xlu0 5
        %1309 = vperm.xlu0 %1308, %v1306
        %v1310 = vpop.permute.xlu0 %1309
        %v1312 = vmul.f32 %v1310, %v660
        %v1313 = vadd.f32 %v1305, %v1312
        %v1314 = vtanh.pop %v1313
        %1316 = vset.pattern.permute.xlu0 6
        %1317 = vperm.xlu0 %1316, %v1314
        %v1318 = vpop.permute.xlu0 %1317
        %v1320 = vmul.f32 %v1318, %v669
        %v1321 = vadd.f32 %v1313, %v1320
        %v1322 = vtanh.pop %v1321
        %1324 = vset.pattern.permute.xlu0 7
        %1325 = vperm.xlu0 %1324, %v1322
        %v1326 = vpop.permute.xlu0 %1325
        %v1328 = vmul.f32 %v1326, %v678
        %v1329 = vadd.f32 %v1321, %v1328
        %v1330 = vxor.u32 %v1329, 2147483648
        %v1331 = vmul.f32 %v1330, 1.442695
        %v1332 = vpow.pop %v1331
        %v1333 = vadd.f32 %v1332, 1.0
        %v1334 = vrcp.pop %v1333
        %v1335 = vmul.f32 %v1333, %v1334
        %v1336 = vsub.f32 1.0, %v1335
        %v1337 = vmul.f32 %v1334, %v1336
        %v1338 = vadd.f32 %v1334, %v1337
        %vm1339 = vweird.f32 %v1333
        %vm1340 = vweird.f32 %v1334
        %vm1341 = vmor %vm1339, %vm1340
        %v1342 = vsel %vm1341, %v1334, %v1338
        %v1343 = vand.u32 2147483647, %v1333
        %vm1344 = vcmp.eq.f32.partialorder %v1343, 8.507059e+37
        %v1345 = vand.u32 %v1333, 2147483648
        %v1346 = vor.u32 1.1754944e-38, %v1345
        %v1347 = vsel %vm1344, %v1346, %v1342
        %v1348 = vmul.f32 1.0, %v1347
        %v1349 = vmul.f32 %v1348, 4.8
        %v1350 = vadd.f32 %v1349, 8.0
        %v1351 = vsel %vm703, %v1350, %v1329
        %s1352 = scalar_lea.vmem %s348, 48 [#allocation3]
        %1353 = vst [vmem:[%s1352] sm:$0xff] %v1351
        %1354 = vmatpush.msra.mxu0 %v368
        %1355 = vmatpush.msra.mxu0 %v367
        %1356 = vmatpush.msra.mxu0 %v366
        %1357 = vmatpush.msra.mxu0 %v365
        %1358 = vmatpush.msra.mxu0 %v364
        %1359 = vmatpush.msra.mxu0 %v363
        %1360 = vmatpush.msra.mxu0 %v362
        %1361 = vmatpush.msra.mxu0 %v361
        %1362 = vmatpush.msra.mxu0 %v360
        %1363 = vmatpush.msra.mxu0 %v359
        %1364 = vmatpush.msra.mxu0 %v358
        %1365 = vmatpush.msra.mxu0 %v357
        %1366 = vmatpush.msra.mxu0 %v356
        %1367 = vmatpush.msra.mxu0 %v355
        %1368 = vmatpush.msra.mxu0 %v354
        %1369 = vmatpush.msra.mxu0 %v353
        %1370 = vmatmul.f32.gmra.mxu0 %v1329
        %v1371 = vpop.f32.mrf.mxu0
        %v1372 = vadd.f32 %v581, %v1371
        %1373 = vdwg.mxu0
        %v1374 = vtanh.pop %v1372
        %1376 = vset.pattern.permute.xlu0 0
        %1377 = vperm.xlu0 %1376, %v1374
        %v1378 = vpop.permute.xlu0 %1377
        %v1380 = vmul.f32 %v1378, %v615
        %v1381 = vadd.f32 %v1372, %v1380
        %v1382 = vtanh.pop %v1381
        %1384 = vset.pattern.permute.xlu0 1
        %1385 = vperm.xlu0 %1384, %v1382
        %v1386 = vpop.permute.xlu0 %1385
        %v1388 = vmul.f32 %v1386, %v624
        %v1389 = vadd.f32 %v1381, %v1388
        %v1390 = vtanh.pop %v1389
        %1392 = vset.pattern.permute.xlu0 2
        %1393 = vperm.xlu0 %1392, %v1390
        %v1394 = vpop.permute.xlu0 %1393
        %v1396 = vmul.f32 %v1394, %v633
        %v1397 = vadd.f32 %v1389, %v1396
        %v1398 = vtanh.pop %v1397
        %1400 = vset.pattern.permute.xlu0 3
        %1401 = vperm.xlu0 %1400, %v1398
        %v1402 = vpop.permute.xlu0 %1401
        %v1404 = vmul.f32 %v1402, %v642
        %v1405 = vadd.f32 %v1397, %v1404
        %v1406 = vtanh.pop %v1405
        %1408 = vset.pattern.permute.xlu0 4
        %1409 = vperm.xlu0 %1408, %v1406
        %v1410 = vpop.permute.xlu0 %1409
        %v1412 = vmul.f32 %v1410, %v651
        %v1413 = vadd.f32 %v1405, %v1412
        %v1414 = vtanh.pop %v1413
        %1416 = vset.pattern.permute.xlu0 5
        %1417 = vperm.xlu0 %1416, %v1414
        %v1418 = vpop.permute.xlu0 %1417
        %v1420 = vmul.f32 %v1418, %v660
        %v1421 = vadd.f32 %v1413, %v1420
        %v1422 = vtanh.pop %v1421
        %1424 = vset.pattern.permute.xlu0 6
        %1425 = vperm.xlu0 %1424, %v1422
        %v1426 = vpop.permute.xlu0 %1425
        %v1428 = vmul.f32 %v1426, %v669
        %v1429 = vadd.f32 %v1421, %v1428
        %v1430 = vtanh.pop %v1429
        %1432 = vset.pattern.permute.xlu0 7
        %1433 = vperm.xlu0 %1432, %v1430
        %v1434 = vpop.permute.xlu0 %1433
        %v1436 = vmul.f32 %v1434, %v678
        %v1437 = vadd.f32 %v1429, %v1436
        %v1438 = vxor.u32 %v1437, 2147483648
        %v1439 = vmul.f32 %v1438, 1.442695
        %v1440 = vpow.pop %v1439
        %v1441 = vadd.f32 %v1440, 1.0
        %v1442 = vrcp.pop %v1441
        %v1443 = vmul.f32 %v1441, %v1442
        %v1444 = vsub.f32 1.0, %v1443
        %v1445 = vmul.f32 %v1442, %v1444
        %v1446 = vadd.f32 %v1442, %v1445
        %vm1447 = vweird.f32 %v1441
        %vm1448 = vweird.f32 %v1442
        %vm1449 = vmor %vm1447, %vm1448
        %v1450 = vsel %vm1449, %v1442, %v1446
        %v1451 = vand.u32 2147483647, %v1441
        %vm1452 = vcmp.eq.f32.partialorder %v1451, 8.507059e+37
        %v1453 = vand.u32 %v1441, 2147483648
        %v1454 = vor.u32 1.1754944e-38, %v1453
        %v1455 = vsel %vm1452, %v1454, %v1450
        %v1456 = vmul.f32 1.0, %v1455
        %v1457 = vmul.f32 %v1456, 4.8
        %v1458 = vadd.f32 %v1457, 8.0
        %v1459 = vsel %vm703, %v1458, %v1437
        %s1460 = scalar_lea.vmem %s348, 56 [#allocation3]
        %1461 = vst [vmem:[%s1460] sm:$0xff] %v1459
        %s1462 = sand.u32 %s183, 1
        %s1463 = sand.u32 %s183, 1
        %s1464 = smul.addr %s1463, 64
        %s1465 = scalar_lea.vmem [#allocation3], %s1464
        // Predicated region
        $region87: #{rollout.1} parent=81 // pred_check
          %p1466 = pneg %p193
        $region88: #{rollout.1} parent=81 // pred_check_branch
          %1468 = sbr.rel (%p1466) target = $region90
        $region89: #{rollout.1} parent=81 // pred_region
          %s1469 = smul.addr %s18, 8
          %s1470 = scalar_lea.vmem %s7, %s1469
          // Predicated region
          $region91: #{rollout.1} parent=89 // pred_check
            _
          $region92: #{rollout.1} parent=89 // pred_check_branch
            %1472 = sbr.rel (0) target = $region94
          $region93: #{rollout.1} parent=89 // pred_region
            // Predicated region
            $region95: #{rollout.1} parent=93 // pred_check
              _
            $region96: #{rollout.1} parent=93 // pred_check_branch
              %1474 = sbr.rel (0) target = $region98
            $region97: #{rollout.1} parent=93 // pred_region
              // Predicated region
              $region110: #{rollout.1} parent=97 // pred_check
                _
              $region111: #{rollout.1} parent=97 // pred_check_branch
                %1504 = sbr.rel (0) target = $region113
              $region112: #{rollout.1} parent=97 // pred_region
                loop: start=0, step=1, limit=1
                $region114: #{rollout.1} parent=112 // loop_pre_header
                  _
                $region115: #{rollout.1} parent=112 // loop_header
                  %s1506 = sphi 0, %s1510
                  %p1507 = scmp.ge.s32.totalorder %s1506, 1
                  %s1511 = sphi %s1465, %s1465
                  %s1512 = sphi %s1470, %s1470
                $region116: #{rollout.1} parent=112 // loop_header_branch
                  %1509 = sbr.rel (%p1507) target = $region120
                $region117: #{rollout.1} parent=112 // loop_body
                  %v1513 = vld [vmem:[%s1511] sm:$0xff]
                  %1514 = vst [vmem:[%s1512] sm:$0xff] %v1513
                  %v1515 = vld [vmem:[%s1511 + $0x8] sm:$0xff]
                  %1516 = vst [vmem:[%s1512 + $0x10] sm:$0xff] %v1515
                  %v1517 = vld [vmem:[%s1511 + $0x10] sm:$0xff]
                  %1518 = vst [vmem:[%s1512 + $0x20] sm:$0xff] %v1517
                  %v1519 = vld [vmem:[%s1511 + $0x18] sm:$0xff]
                  %1520 = vst [vmem:[%s1512 + $0x30] sm:$0xff] %v1519
                  %v1521 = vld [vmem:[%s1511 + $0x20] sm:$0xff]
                  %1522 = vst [vmem:[%s1512 + $0x40] sm:$0xff] %v1521
                  %v1523 = vld [vmem:[%s1511 + $0x28] sm:$0xff]
                  %1524 = vst [vmem:[%s1512 + $0x50] sm:$0xff] %v1523
                  %v1525 = vld [vmem:[%s1511 + $0x30] sm:$0xff]
                  %1526 = vst [vmem:[%s1512 + $0x60] sm:$0xff] %v1525
                  %v1527 = vld [vmem:[%s1511 + $0x38] sm:$0xff]
                  %1528 = vst [vmem:[%s1512 + $0x70] sm:$0xff] %v1527
                $region118: #{rollout.1} parent=112 // loop_footer
                  %s1510 = sadd.s32 1, %s1506
                $region119: #{rollout.1} parent=112 // loop_footer_branch
                  %1505 = sbr.rel target = $region115
                $region120: #{rollout.1} parent=112 // loop_exit
                  _
              $region113: #{rollout.1} parent=97 // pred_fallthru
                _
              // Predicated region
              $region121: #{rollout.1} parent=97 // pred_check
                _
              $region122: #{rollout.1} parent=97 // pred_check_branch
                %1530 = sbr.rel target = $region124
              $region123: #{rollout.1} parent=97 // pred_region
                _
              $region124: #{rollout.1} parent=97 // pred_fallthru
                _
            $region98: #{rollout.1} parent=93 // pred_fallthru
              _
            // Predicated region
            $region99: #{rollout.1} parent=93 // pred_check
              _
            $region100: #{rollout.1} parent=93 // pred_check_branch
              %1476 = sbr.rel target = $region102
            $region101: #{rollout.1} parent=93 // pred_region
              %s1478 = ssub.s32 256, 1
              loop: start=0, step=1, limit=1
              $region103: #{rollout.1} parent=101 // loop_pre_header
                _
              $region104: #{rollout.1} parent=101 // loop_header
                %s1480 = sphi 0, %s1484
                %p1481 = scmp.ge.s32.totalorder %s1480, 1
                %s1485 = sphi %s1465, %s1465
                %s1486 = sphi %s1470, %s1470
              $region105: #{rollout.1} parent=101 // loop_header_branch
                %1483 = sbr.rel (%p1481) target = $region109
              $region106: #{rollout.1} parent=101 // loop_body
                %v1487 = vld [vmem:[%s1485] sm:%s1478]
                %1488 = vst [vmem:[%s1486] sm:%s1478] %v1487
                %v1489 = vld [vmem:[%s1485 + $0x8] sm:%s1478]
                %1490 = vst [vmem:[%s1486 + $0x10] sm:%s1478] %v1489
                %v1491 = vld [vmem:[%s1485 + $0x10] sm:%s1478]
                %1492 = vst [vmem:[%s1486 + $0x20] sm:%s1478] %v1491
                %v1493 = vld [vmem:[%s1485 + $0x18] sm:%s1478]
                %1494 = vst [vmem:[%s1486 + $0x30] sm:%s1478] %v1493
                %v1495 = vld [vmem:[%s1485 + $0x20] sm:%s1478]
                %1496 = vst [vmem:[%s1486 + $0x40] sm:%s1478] %v1495
                %v1497 = vld [vmem:[%s1485 + $0x28] sm:%s1478]
                %1498 = vst [vmem:[%s1486 + $0x50] sm:%s1478] %v1497
                %v1499 = vld [vmem:[%s1485 + $0x30] sm:%s1478]
                %1500 = vst [vmem:[%s1486 + $0x60] sm:%s1478] %v1499
                %v1501 = vld [vmem:[%s1485 + $0x38] sm:%s1478]
                %1502 = vst [vmem:[%s1486 + $0x70] sm:%s1478] %v1501
              $region107: #{rollout.1} parent=101 // loop_footer
                %s1484 = sadd.s32 1, %s1480
              $region108: #{rollout.1} parent=101 // loop_footer_branch
                %1479 = sbr.rel target = $region104
              $region109: #{rollout.1} parent=101 // loop_exit
                _
            $region102: #{rollout.1} parent=93 // pred_fallthru
              _
          $region94: #{rollout.1} parent=89 // pred_fallthru
            _
          %1531 = vnop
        $region90: #{rollout.1} parent=81 // pred_fallthru
          _
      $region82: #{rollout.1} parent=5 // pred_fallthru
        _
      %p1532 = scmp.le.s32.totalorder 2, %s13
      // Predicated region
      $region125: #{rollout.1} parent=5 // pred_check
        %p1533 = pneg %p1532
      $region126: #{rollout.1} parent=5 // pred_check_branch
        %1535 = sbr.rel (%p1533) target = $region128
      $region127: #{rollout.1} parent=5 // pred_region
        %s1536 = ssub.s32 %s13, 2
        // Predicated region
        $region129: #{rollout.1} parent=127 // pred_check
          %p1537 = pneg %p199
        $region130: #{rollout.1} parent=127 // pred_check_branch
          %1539 = sbr.rel (%p1537) target = $region132
        $region131: #{rollout.1} parent=127 // pred_region
          %s1540 = sand.u32 %s184, 1
          %s1541 = sand.u32 %s184, 1
          %s1542 = smul.addr %s1541, 64
          %s1543 = scalar_lea.vmem [#allocation3], %s1542
        $region132: #{rollout.1} parent=127 // pred_fallthru
          _
      $region128: #{rollout.1} parent=5 // pred_fallthru
        _
    $region6: #{rollout.1} parent=1 // loop_footer
      %s17 = sadd.s32 1, %s13
    $region7: #{rollout.1} parent=1 // loop_footer_branch
      %12 = sbr.rel target = $region3
    $region8: #{rollout.1} parent=1 // loop_exit
      _

</llo_original>
